<compile_context>
chip_gen: v5e
topology: v5e:2x2
jax: 0.10.0
libtpu: 0.0.40
codegen_flags: <defaults>
</compile_context>

<pallas_src>
import jax
import jax.numpy as jnp
from jax import lax
from jax.experimental import pallas as pl
from jax.experimental.pallas import tpu as pltpu

_EPS = 1e-5


def _bn_fold(gamma, beta, mean, var, eps=_EPS):
    scale = gamma / jnp.sqrt(var + eps)
    bias = beta - mean * scale
    return scale, bias


# ---------------------------------------------------------------------------
# Fused BasicBlock kernel (per grid step = one image, everything in VMEM)
# ---------------------------------------------------------------------------
def _make_block_kernel(stride, skipexist, cin, planes, ho, wo):
    s = stride
    npar = s * s
    m2 = ho * wo
    taps = [(dy, dx) for dy in range(3) for dx in range(3)]

    def kernel(*refs):
        xrefs = refs[:npar]                                  # parity views of x_pad
        w1_ref, b1_ref, w2_ref, b2_ref = refs[npar:npar + 4]
        pos = npar + 4
        if skipexist:
            w3_ref = refs[pos]
            pos += 1
        o_ref = refs[pos]
        out1_ref = refs[pos + 1]                             # VMEM scratch (ho+2, wo+2, P)

        def x_tap(dy, dx):
            # Contiguous (ho, wo, cin) window of the padded input for tap (dy, dx).
            py, px = dy % s, dx % s
            r = xrefs[py * s + px]
            oy, ox = dy // s, dx // s
            return r[0, oy:oy + ho, ox:ox + wo, :].reshape(m2, cin)

        # ---- conv1 (3x3, stride s) + bn1 + relu1 : 9 accumulated MXU dots ----
        acc = jnp.zeros((m2, planes), jnp.float32)
        for t, (dy, dx) in enumerate(taps):
            acc = acc + jnp.dot(x_tap(dy, dx), w1_ref[t],
                                preferred_element_type=jnp.float32)
        out1 = jnp.maximum(acc + b1_ref[...], 0.0).astype(jnp.bfloat16)

        # Keep out1 (+ 1px zero halo for conv2) entirely in VMEM — no HBM trip.
        out1_ref[...] = jnp.zeros_like(out1_ref)
        out1_ref[1:1 + ho, 1:1 + wo, :] = out1.reshape(ho, wo, planes)

        # ---- conv2 (3x3, stride 1) + bn2 (+ fused skip) + relu2 ----
        acc = jnp.zeros((m2, planes), jnp.float32)
        for t, (dy, dx) in enumerate(taps):
            v = out1_ref[dy:dy + ho, dx:dx + wo, :].reshape(m2, planes)
            acc = acc + jnp.dot(v, w2_ref[t], preferred_element_type=jnp.float32)

        if skipexist:
            # 1x1 projection skip (bn3 pre-folded into w3; b3 folded into b2).
            p0 = 1 % s
            r = xrefs[p0 * s + p0]
            o0 = (1 - p0) // s
            xs = r[0, o0:o0 + ho, o0:o0 + wo, :].reshape(m2, cin)
            acc = acc + jnp.dot(xs, w3_ref[...], preferred_element_type=jnp.float32)
        else:
            # Identity skip == interior of the padded input (stride 1, cin == planes).
            res = xrefs[0][0, 1:1 + ho, 1:1 + wo, :].reshape(m2, planes)
            acc = acc + res.astype(jnp.float32)

        out = jnp.maximum(acc + b2_ref[...], 0.0).astype(o_ref.dtype)
        o_ref[0] = out.reshape(ho, wo, planes)

    return kernel


# ---------------------------------------------------------------------------
# Wrapper: BN folding, parity decomposition of the padded input, pallas_call
# ---------------------------------------------------------------------------
def basic_block_forward(x_nchw, params, stride):
    x = jnp.transpose(x_nchw, (0, 2, 3, 1)).astype(jnp.float32)      # NHWC, f32
    n, h, w, cin = x.shape
    planes = params["conv1_w"].shape[0]
    s = stride
    skipexist = (s != 1) or (cin != planes)
    ho = (h + 2 - 3) // s + 1
    wo = (w + 2 - 3) // s + 1

    # Fold eval-mode BN into weights / per-channel biases (one-time constant fold).
    s1, b1 = _bn_fold(params["bn1_gamma"], params["bn1_beta"],
                      params["bn1_mean"], params["bn1_var"])
    s2, b2 = _bn_fold(params["bn2_gamma"], params["bn2_beta"],
                      params["bn2_mean"], params["bn2_var"])
    # (O, I, 3, 3) -> (9, I, O) matching the in-kernel tap order t = dy*3 + dx.
    w1g = (jnp.transpose(params["conv1_w"], (2, 3, 1, 0)).reshape(9, cin, planes)
           * s1[None, None, :]).astype(jnp.bfloat16)
    w2g = (jnp.transpose(params["conv2_w"], (2, 3, 1, 0)).reshape(9, planes, planes)
           * s2[None, None, :]).astype(jnp.bfloat16)
    b2t = b2
    extra_inputs, extra_specs = [], []
    if skipexist:
        s3, b3 = _bn_fold(params["bn3_gamma"], params["bn3_beta"],
                          params["bn3_mean"], params["bn3_var"])
        w3g = (jnp.transpose(params["conv3_w"], (2, 3, 1, 0)).reshape(cin, planes)
               * s3[None, :]).astype(jnp.bfloat16)
        b2t = b2 + b3
        extra_inputs = [w3g]
        extra_specs = [pl.BlockSpec((cin, planes), lambda i: (0, 0))]

    # Parity-decomposed, zero-padded bf16 input: total bytes == one padded copy.
    x_pad = jnp.pad(x.astype(jnp.bfloat16), ((0, 0), (1, 1), (1, 1), (0, 0)))
    hpar = -(-(h + 2) // s)
    wpar = -(-(w + 2) // s)
    parts = []
    for py in range(s):
        for px in range(s):
            p = x_pad[:, py::s, px::s, :]
            p = jnp.pad(p, ((0, 0), (0, hpar - p.shape[1]),
                            (0, wpar - p.shape[2]), (0, 0)))
            parts.append(p)

    inputs = parts + [w1g, b1.reshape(1, planes).astype(jnp.float32),
                      w2g, b2t.reshape(1, planes).astype(jnp.float32)] + extra_inputs
    in_specs = ([pl.BlockSpec((1, hpar, wpar, cin), lambda i: (i, 0, 0, 0))
                 for _ in parts]
                + [pl.BlockSpec((9, cin, planes), lambda i: (0, 0, 0)),
                   pl.BlockSpec((1, planes), lambda i: (0, 0)),
                   pl.BlockSpec((9, planes, planes), lambda i: (0, 0, 0)),
                   pl.BlockSpec((1, planes), lambda i: (0, 0))]
                + extra_specs)

    flops = 2 * n * ho * wo * planes * (9 * cin + 9 * planes
                                        + (cin if skipexist else 0))
    bytes_accessed = int(sum(p.size for p in parts) * 2
                         + w1g.size * 2 + w2g.size * 2
                         + (extra_inputs[0].size * 2 if skipexist else 0)
                         + 2 * planes * 4
                         + n * ho * wo * planes * 2)

    out = pl.pallas_call(
        _make_block_kernel(s, skipexist, cin, planes, ho, wo),
        out_shape=jax.ShapeDtypeStruct((n, ho, wo, planes), jnp.bfloat16),
        grid=(n,),
        in_specs=in_specs,
        out_specs=pl.BlockSpec((1, ho, wo, planes), lambda i: (i, 0, 0, 0)),
        scratch_shapes=[pltpu.VMEM((ho + 2, wo + 2, planes), jnp.bfloat16)],
        compiler_params=pltpu.CompilerParams(
            dimension_semantics=("parallel",),
            vmem_limit_bytes=32 * 1024 * 1024),
        cost_estimate=pl.CostEstimate(flops=flops, transcendentals=0,
                                      bytes_accessed=bytes_accessed),
    )(*inputs)
    return jnp.transpose(out, (0, 3, 1, 2)).astype(jnp.float32)       # back to NCHW


# ---------------------------------------------------------------------------
# Pure-JAX reference (lax.conv, f32) for correctness checking
# ---------------------------------------------------------------------------
def _ref_bn(x_nchw, gamma, beta, mean, var, eps=_EPS):
    inv = gamma / jnp.sqrt(var + eps)
    return (x_nchw * inv[None, :, None, None]
            + (beta - mean * inv)[None, :, None, None])


def _ref_conv(x_nchw, w_oihw, stride, pad):
    return lax.conv_general_dilated(
        x_nchw, w_oihw, (stride, stride), [(pad, pad), (pad, pad)],
        dimension_numbers=("NCHW", "OIHW", "NCHW"))


def reference_forward(x_nchw, params, stride):
    cin = x_nchw.shape[1]
    planes = params["conv1_w"].shape[0]
    skipexist = (stride != 1) or (cin != planes)

    out = _ref_conv(x_nchw, params["conv1_w"], stride, 1)
    out = _ref_bn(out, params["bn1_gamma"], params["bn1_beta"],
                  params["bn1_mean"], params["bn1_var"])
    out = jnp.maximum(out, 0.0)
    out = _ref_conv(out, params["conv2_w"], 1, 1)
    out = _ref_bn(out, params["bn2_gamma"], params["bn2_beta"],
                  params["bn2_mean"], params["bn2_var"])
    if skipexist:
        identity = _ref_conv(x_nchw, params["conv3_w"], stride, 0)
        identity = _ref_bn(identity, params["bn3_gamma"], params["bn3_beta"],
                           params["bn3_mean"], params["bn3_var"])
    else:
        identity = x_nchw
    return jnp.maximum(out + identity, 0.0)


# ---------------------------------------------------------------------------
# Deterministic parameter construction
# ---------------------------------------------------------------------------
def make_params(key, in_planes, planes, skipexist):
    ks = jax.random.split(key, 16)
    p = {
        "conv1_w": 0.2 * jax.random.normal(ks[0], (planes, in_planes, 3, 3), jnp.float32),
        "conv2_w": 0.2 * jax.random.normal(ks[1], (planes, planes, 3, 3), jnp.float32),
        "bn1_gamma": 1.0 + 0.1 * jax.random.normal(ks[2], (planes,), jnp.float32),
        "bn1_beta": 0.1 * jax.random.normal(ks[3], (planes,), jnp.float32),
        "bn1_mean": 0.1 * jax.random.normal(ks[4], (planes,), jnp.float32),
        "bn1_var": jax.random.uniform(ks[5], (planes,), jnp.float32, 0.5, 1.5),
        "bn2_gamma": 1.0 + 0.1 * jax.random.normal(ks[6], (planes,), jnp.float32),
        "bn2_beta": 0.1 * jax.random.normal(ks[7], (planes,), jnp.float32),
        "bn2_mean": 0.1 * jax.random.normal(ks[8], (planes,), jnp.float32),
        "bn2_var": jax.random.uniform(ks[9], (planes,), jnp.float32, 0.5, 1.5),
    }
    if skipexist:
        p.update({
            "conv3_w": 0.2 * jax.random.normal(ks[10], (planes, in_planes, 1, 1), jnp.float32),
            "bn3_gamma": 1.0 + 0.1 * jax.random.normal(ks[11], (planes,), jnp.float32),
            "bn3_beta": 0.1 * jax.random.normal(ks[12], (planes,), jnp.float32),
            "bn3_mean": 0.1 * jax.random.normal(ks[13], (planes,), jnp.float32),
            "bn3_var": jax.random.uniform(ks[14], (planes,), jnp.float32, 0.5, 1.5),
        })
    return p


if __name__ == "__main__":
    key = jax.random.PRNGKey(0)
    k_x, k_p, k_x2, k_p2 = jax.random.split(key, 4)

    fwd = jax.jit(basic_block_forward, static_argnames=("stride",))

    # Config A: projection skip (conv1x1 + bn3): in_planes=4 -> planes=8, stride=2.
    N, CIN, PLANES, H, W, STRIDE = 2, 4, 8, 16, 16, 2
    x = jax.random.normal(k_x, (N, CIN, H, W), jnp.float32)          # NCHW input
    params = make_params(k_p, CIN, PLANES, skipexist=True)
    out = jax.block_until_ready(fwd(x, params, stride=STRIDE))
    ref = jax.block_until_ready(reference_forward(x, params, STRIDE))
    assert out.shape == ref.shape == (N, PLANES, H // STRIDE, W // STRIDE), out.shape
    # bf16 MXU inputs / bf16 activations & output -> relaxed tolerance vs f32 ref.
    assert jnp.allclose(out, ref, atol=2e-1, rtol=2e-2), (
        float(jnp.max(jnp.abs(out - ref))))

    # Config B: identity skip: in_planes == planes == 8, stride=1.
    x2 = jax.random.normal(k_x2, (N, PLANES, H, W), jnp.float32)
    params2 = make_params(k_p2, PLANES, PLANES, skipexist=False)
    out2 = jax.block_until_ready(fwd(x2, params2, stride=1))
    ref2 = jax.block_until_ready(reference_forward(x2, params2, 1))
    assert out2.shape == ref2.shape == (N, PLANES, H, W), out2.shape
    assert jnp.allclose(out2, ref2, atol=2e-1, rtol=2e-2), (
        float(jnp.max(jnp.abs(out2 - ref2))))

    print("KERNEL_OK")
</pallas_src>

<mosaic_0001>
module attributes {stable_mosaic.version = 11 : i64} {
  func.func @kernel(%arg0: i32, %arg1: memref<1x9x9x4xbf16, #tpu.memory_space<vmem>>, %arg2: memref<1x9x9x4xbf16, #tpu.memory_space<vmem>>, %arg3: memref<1x9x9x4xbf16, #tpu.memory_space<vmem>>, %arg4: memref<1x9x9x4xbf16, #tpu.memory_space<vmem>>, %arg5: memref<9x4x8xbf16, #tpu.memory_space<vmem>>, %arg6: memref<1x8xf32, #tpu.memory_space<vmem>>, %arg7: memref<9x8x8xbf16, #tpu.memory_space<vmem>>, %arg8: memref<1x8xf32, #tpu.memory_space<vmem>>, %arg9: memref<4x8xbf16, #tpu.memory_space<vmem>>, %arg10: memref<1x8x8x8xbf16, #tpu.memory_space<vmem>>, %arg11: memref<10x10x8xbf16, #tpu.memory_space<vmem>>) attributes {dimension_semantics = [#tpu.dimension_semantics<parallel>], iteration_bounds = array<i64: 2>, scalar_prefetch = 0 : i64, scratch_operands = 1 : i64, tpu.core_type = #tpu.core_type<tc>, window_params = [{transform_indices = @transform_0, window_bounds = array<i64: 1, 9, 9, 4>}, {transform_indices = @transform_1, window_bounds = array<i64: 1, 9, 9, 4>}, {transform_indices = @transform_2, window_bounds = array<i64: 1, 9, 9, 4>}, {transform_indices = @transform_3, window_bounds = array<i64: 1, 9, 9, 4>}, {pipeline_mode = #tpu.pipeline_mode<synchronous>, transform_indices = @transform_4, window_bounds = array<i64: 9, 4, 8>}, {pipeline_mode = #tpu.pipeline_mode<synchronous>, transform_indices = @transform_5, window_bounds = array<i64: 1, 8>}, {pipeline_mode = #tpu.pipeline_mode<synchronous>, transform_indices = @transform_6, window_bounds = array<i64: 9, 8, 8>}, {pipeline_mode = #tpu.pipeline_mode<synchronous>, transform_indices = @transform_7, window_bounds = array<i64: 1, 8>}, {pipeline_mode = #tpu.pipeline_mode<synchronous>, transform_indices = @transform_8, window_bounds = array<i64: 4, 8>}, {transform_indices = @transform_9, window_bounds = array<i64: 1, 8, 8, 8>}]} {
    %cst = arith.constant 0.000000e+00 : f32
    %0 = vector.broadcast %cst : f32 to vector<64x8xf32>
    %c0 = arith.constant 0 : index
    %c0_0 = arith.constant 0 : index
    %c0_1 = arith.constant 0 : index
    %c0_2 = arith.constant 0 : index
    %1 = vector.load %arg1[%c0, %c0_0, %c0_1, %c0_2] : memref<1x9x9x4xbf16, #tpu.memory_space<vmem>>, vector<1x8x8x4xbf16>
    %2 = vector.shape_cast %1 : vector<1x8x8x4xbf16> to vector<8x8x4xbf16>
    %3 = vector.shape_cast %2 : vector<8x8x4xbf16> to vector<64x4xbf16>
    %c0_3 = arith.constant 0 : index
    %c0_4 = arith.constant 0 : index
    %c0_5 = arith.constant 0 : index
    %4 = vector.load %arg5[%c0_3, %c0_4, %c0_5] : memref<9x4x8xbf16, #tpu.memory_space<vmem>>, vector<1x4x8xbf16>
    %5 = vector.shape_cast %4 : vector<1x4x8xbf16> to vector<4x8xbf16>
    %cst_6 = arith.constant dense<0.000000e+00> : vector<64x8xf32>
    %6 = tpu.matmul %3, %5, %cst_6 {dimension_numbers = #tpu.dot_dimension_numbers<[1], [0], [0], [1], [0, 0, 1, 1], [], []>} : vector<64x4xbf16>, vector<4x8xbf16>, vector<64x8xf32> -> vector<64x8xf32>
    %7 = arith.addf %0, %6 : vector<64x8xf32>
    %c0_7 = arith.constant 0 : index
    %c0_8 = arith.constant 0 : index
    %c0_9 = arith.constant 0 : index
    %c0_10 = arith.constant 0 : index
    %8 = vector.load %arg2[%c0_7, %c0_8, %c0_9, %c0_10] : memref<1x9x9x4xbf16, #tpu.memory_space<vmem>>, vector<1x8x8x4xbf16>
    %9 = vector.shape_cast %8 : vector<1x8x8x4xbf16> to vector<8x8x4xbf16>
    %10 = vector.shape_cast %9 : vector<8x8x4xbf16> to vector<64x4xbf16>
    %c1 = arith.constant 1 : index
    %c0_11 = arith.constant 0 : index
    %c0_12 = arith.constant 0 : index
    %11 = vector.load %arg5[%c1, %c0_11, %c0_12] : memref<9x4x8xbf16, #tpu.memory_space<vmem>>, vector<1x4x8xbf16>
    %12 = vector.shape_cast %11 : vector<1x4x8xbf16> to vector<4x8xbf16>
    %cst_13 = arith.constant dense<0.000000e+00> : vector<64x8xf32>
    %13 = tpu.matmul %10, %12, %cst_13 {dimension_numbers = #tpu.dot_dimension_numbers<[1], [0], [0], [1], [0, 0, 1, 1], [], []>} : vector<64x4xbf16>, vector<4x8xbf16>, vector<64x8xf32> -> vector<64x8xf32>
    %14 = arith.addf %7, %13 : vector<64x8xf32>
    %c0_14 = arith.constant 0 : index
    %c0_15 = arith.constant 0 : index
    %c1_16 = arith.constant 1 : index
    %c0_17 = arith.constant 0 : index
    %15 = vector.load %arg1[%c0_14, %c0_15, %c1_16, %c0_17] : memref<1x9x9x4xbf16, #tpu.memory_space<vmem>>, vector<1x8x8x4xbf16>
    %16 = vector.shape_cast %15 : vector<1x8x8x4xbf16> to vector<8x8x4xbf16>
    %17 = vector.shape_cast %16 : vector<8x8x4xbf16> to vector<64x4xbf16>
    %c2 = arith.constant 2 : index
    %c0_18 = arith.constant 0 : index
    %c0_19 = arith.constant 0 : index
    %18 = vector.load %arg5[%c2, %c0_18, %c0_19] : memref<9x4x8xbf16, #tpu.memory_space<vmem>>, vector<1x4x8xbf16>
    %19 = vector.shape_cast %18 : vector<1x4x8xbf16> to vector<4x8xbf16>
    %cst_20 = arith.constant dense<0.000000e+00> : vector<64x8xf32>
    %20 = tpu.matmul %17, %19, %cst_20 {dimension_numbers = #tpu.dot_dimension_numbers<[1], [0], [0], [1], [0, 0, 1, 1], [], []>} : vector<64x4xbf16>, vector<4x8xbf16>, vector<64x8xf32> -> vector<64x8xf32>
    %21 = arith.addf %14, %20 : vector<64x8xf32>
    %c0_21 = arith.constant 0 : index
    %c0_22 = arith.constant 0 : index
    %c0_23 = arith.constant 0 : index
    %c0_24 = arith.constant 0 : index
    %22 = vector.load %arg3[%c0_21, %c0_22, %c0_23, %c0_24] : memref<1x9x9x4xbf16, #tpu.memory_space<vmem>>, vector<1x8x8x4xbf16>
    %23 = vector.shape_cast %22 : vector<1x8x8x4xbf16> to vector<8x8x4xbf16>
    %24 = vector.shape_cast %23 : vector<8x8x4xbf16> to vector<64x4xbf16>
    %c3 = arith.constant 3 : index
    %c0_25 = arith.constant 0 : index
    %c0_26 = arith.constant 0 : index
    %25 = vector.load %arg5[%c3, %c0_25, %c0_26] : memref<9x4x8xbf16, #tpu.memory_space<vmem>>, vector<1x4x8xbf16>
    %26 = vector.shape_cast %25 : vector<1x4x8xbf16> to vector<4x8xbf16>
    %cst_27 = arith.constant dense<0.000000e+00> : vector<64x8xf32>
    %27 = tpu.matmul %24, %26, %cst_27 {dimension_numbers = #tpu.dot_dimension_numbers<[1], [0], [0], [1], [0, 0, 1, 1], [], []>} : vector<64x4xbf16>, vector<4x8xbf16>, vector<64x8xf32> -> vector<64x8xf32>
    %28 = arith.addf %21, %27 : vector<64x8xf32>
    %c0_28 = arith.constant 0 : index
    %c0_29 = arith.constant 0 : index
    %c0_30 = arith.constant 0 : index
    %c0_31 = arith.constant 0 : index
    %29 = vector.load %arg4[%c0_28, %c0_29, %c0_30, %c0_31] : memref<1x9x9x4xbf16, #tpu.memory_space<vmem>>, vector<1x8x8x4xbf16>
    %30 = vector.shape_cast %29 : vector<1x8x8x4xbf16> to vector<8x8x4xbf16>
    %31 = vector.shape_cast %30 : vector<8x8x4xbf16> to vector<64x4xbf16>
    %c4 = arith.constant 4 : index
    %c0_32 = arith.constant 0 : index
    %c0_33 = arith.constant 0 : index
    %32 = vector.load %arg5[%c4, %c0_32, %c0_33] : memref<9x4x8xbf16, #tpu.memory_space<vmem>>, vector<1x4x8xbf16>
    %33 = vector.shape_cast %32 : vector<1x4x8xbf16> to vector<4x8xbf16>
    %cst_34 = arith.constant dense<0.000000e+00> : vector<64x8xf32>
    %34 = tpu.matmul %31, %33, %cst_34 {dimension_numbers = #tpu.dot_dimension_numbers<[1], [0], [0], [1], [0, 0, 1, 1], [], []>} : vector<64x4xbf16>, vector<4x8xbf16>, vector<64x8xf32> -> vector<64x8xf32>
    %35 = arith.addf %28, %34 : vector<64x8xf32>
    %c0_35 = arith.constant 0 : index
    %c0_36 = arith.constant 0 : index
    %c1_37 = arith.constant 1 : index
    %c0_38 = arith.constant 0 : index
    %36 = vector.load %arg3[%c0_35, %c0_36, %c1_37, %c0_38] : memref<1x9x9x4xbf16, #tpu.memory_space<vmem>>, vector<1x8x8x4xbf16>
    %37 = vector.shape_cast %36 : vector<1x8x8x4xbf16> to vector<8x8x4xbf16>
    %38 = vector.shape_cast %37 : vector<8x8x4xbf16> to vector<64x4xbf16>
    %c5 = arith.constant 5 : index
    %c0_39 = arith.constant 0 : index
    %c0_40 = arith.constant 0 : index
    %39 = vector.load %arg5[%c5, %c0_39, %c0_40] : memref<9x4x8xbf16, #tpu.memory_space<vmem>>, vector<1x4x8xbf16>
    %40 = vector.shape_cast %39 : vector<1x4x8xbf16> to vector<4x8xbf16>
    %cst_41 = arith.constant dense<0.000000e+00> : vector<64x8xf32>
    %41 = tpu.matmul %38, %40, %cst_41 {dimension_numbers = #tpu.dot_dimension_numbers<[1], [0], [0], [1], [0, 0, 1, 1], [], []>} : vector<64x4xbf16>, vector<4x8xbf16>, vector<64x8xf32> -> vector<64x8xf32>
    %42 = arith.addf %35, %41 : vector<64x8xf32>
    %c0_42 = arith.constant 0 : index
    %c1_43 = arith.constant 1 : index
    %c0_44 = arith.constant 0 : index
    %c0_45 = arith.constant 0 : index
    %43 = vector.load %arg1[%c0_42, %c1_43, %c0_44, %c0_45] : memref<1x9x9x4xbf16, #tpu.memory_space<vmem>>, vector<1x8x8x4xbf16>
    %44 = vector.shape_cast %43 : vector<1x8x8x4xbf16> to vector<8x8x4xbf16>
    %45 = vector.shape_cast %44 : vector<8x8x4xbf16> to vector<64x4xbf16>
    %c6 = arith.constant 6 : index
    %c0_46 = arith.constant 0 : index
    %c0_47 = arith.constant 0 : index
    %46 = vector.load %arg5[%c6, %c0_46, %c0_47] : memref<9x4x8xbf16, #tpu.memory_space<vmem>>, vector<1x4x8xbf16>
    %47 = vector.shape_cast %46 : vector<1x4x8xbf16> to vector<4x8xbf16>
    %cst_48 = arith.constant dense<0.000000e+00> : vector<64x8xf32>
    %48 = tpu.matmul %45, %47, %cst_48 {dimension_numbers = #tpu.dot_dimension_numbers<[1], [0], [0], [1], [0, 0, 1, 1], [], []>} : vector<64x4xbf16>, vector<4x8xbf16>, vector<64x8xf32> -> vector<64x8xf32>
    %49 = arith.addf %42, %48 : vector<64x8xf32>
    %c0_49 = arith.constant 0 : index
    %c1_50 = arith.constant 1 : index
    %c0_51 = arith.constant 0 : index
    %c0_52 = arith.constant 0 : index
    %50 = vector.load %arg2[%c0_49, %c1_50, %c0_51, %c0_52] : memref<1x9x9x4xbf16, #tpu.memory_space<vmem>>, vector<1x8x8x4xbf16>
    %51 = vector.shape_cast %50 : vector<1x8x8x4xbf16> to vector<8x8x4xbf16>
    %52 = vector.shape_cast %51 : vector<8x8x4xbf16> to vector<64x4xbf16>
    %c7 = arith.constant 7 : index
    %c0_53 = arith.constant 0 : index
    %c0_54 = arith.constant 0 : index
    %53 = vector.load %arg5[%c7, %c0_53, %c0_54] : memref<9x4x8xbf16, #tpu.memory_space<vmem>>, vector<1x4x8xbf16>
    %54 = vector.shape_cast %53 : vector<1x4x8xbf16> to vector<4x8xbf16>
    %cst_55 = arith.constant dense<0.000000e+00> : vector<64x8xf32>
    %55 = tpu.matmul %52, %54, %cst_55 {dimension_numbers = #tpu.dot_dimension_numbers<[1], [0], [0], [1], [0, 0, 1, 1], [], []>} : vector<64x4xbf16>, vector<4x8xbf16>, vector<64x8xf32> -> vector<64x8xf32>
    %56 = arith.addf %49, %55 : vector<64x8xf32>
    %c0_56 = arith.constant 0 : index
    %c1_57 = arith.constant 1 : index
    %c1_58 = arith.constant 1 : index
    %c0_59 = arith.constant 0 : index
    %57 = vector.load %arg1[%c0_56, %c1_57, %c1_58, %c0_59] : memref<1x9x9x4xbf16, #tpu.memory_space<vmem>>, vector<1x8x8x4xbf16>
    %58 = vector.shape_cast %57 : vector<1x8x8x4xbf16> to vector<8x8x4xbf16>
    %59 = vector.shape_cast %58 : vector<8x8x4xbf16> to vector<64x4xbf16>
    %c8 = arith.constant 8 : index
    %c0_60 = arith.constant 0 : index
    %c0_61 = arith.constant 0 : index
    %60 = vector.load %arg5[%c8, %c0_60, %c0_61] : memref<9x4x8xbf16, #tpu.memory_space<vmem>>, vector<1x4x8xbf16>
    %61 = vector.shape_cast %60 : vector<1x4x8xbf16> to vector<4x8xbf16>
    %cst_62 = arith.constant dense<0.000000e+00> : vector<64x8xf32>
    %62 = tpu.matmul %59, %61, %cst_62 {dimension_numbers = #tpu.dot_dimension_numbers<[1], [0], [0], [1], [0, 0, 1, 1], [], []>} : vector<64x4xbf16>, vector<4x8xbf16>, vector<64x8xf32> -> vector<64x8xf32>
    %63 = arith.addf %56, %62 : vector<64x8xf32>
    %c0_63 = arith.constant 0 : index
    %c0_64 = arith.constant 0 : index
    %64 = vector.load %arg6[%c0_63, %c0_64] : memref<1x8xf32, #tpu.memory_space<vmem>>, vector<1x8xf32>
    %65 = vector.broadcast %64 : vector<1x8xf32> to vector<64x8xf32>
    %66 = arith.addf %63, %65 : vector<64x8xf32>
    %cst_65 = arith.constant 0.000000e+00 : f32
    %67 = vector.broadcast %cst_65 : f32 to vector<64x8xf32>
    %68 = arith.maximumf %66, %67 : vector<64x8xf32>
    %69 = arith.truncf %68 : vector<64x8xf32> to vector<64x8xbf16>
    %cst_66 = arith.constant 0.000000e+00 : bf16
    %70 = vector.broadcast %cst_66 : bf16 to vector<10x10x8xbf16>
    %c0_67 = arith.constant 0 : index
    %c0_68 = arith.constant 0 : index
    %c0_69 = arith.constant 0 : index
    %71 = vector.load %arg11[%c0_67, %c0_68, %c0_69] : memref<10x10x8xbf16, #tpu.memory_space<vmem>>, vector<10x10x8xbf16>
    tpu.vector_store %arg11[%c0_67, %c0_68, %c0_69], %70 {strides = array<i32>} : memref<10x10x8xbf16, #tpu.memory_space<vmem>>, vector<10x10x8xbf16>,
    %72 = vector.shape_cast %69 : vector<64x8xbf16> to vector<8x8x8xbf16>
    %c1_70 = arith.constant 1 : index
    %c1_71 = arith.constant 1 : index
    %c0_72 = arith.constant 0 : index
    %73 = vector.load %arg11[%c1_70, %c1_71, %c0_72] : memref<10x10x8xbf16, #tpu.memory_space<vmem>>, vector<8x8x8xbf16>
    tpu.vector_store %arg11[%c1_70, %c1_71, %c0_72], %72 {strides = array<i32>} : memref<10x10x8xbf16, #tpu.memory_space<vmem>>, vector<8x8x8xbf16>,
    %cst_73 = arith.constant 0.000000e+00 : f32
    %74 = vector.broadcast %cst_73 : f32 to vector<64x8xf32>
    %c0_74 = arith.constant 0 : index
    %c0_75 = arith.constant 0 : index
    %c0_76 = arith.constant 0 : index
    %75 = vector.load %arg11[%c0_74, %c0_75, %c0_76] : memref<10x10x8xbf16, #tpu.memory_space<vmem>>, vector<8x8x8xbf16>
    %76 = vector.shape_cast %75 : vector<8x8x8xbf16> to vector<64x8xbf16>
    %c0_77 = arith.constant 0 : index
    %c0_78 = arith.constant 0 : index
    %c0_79 = arith.constant 0 : index
    %77 = vector.load %arg7[%c0_77, %c0_78, %c0_79] : memref<9x8x8xbf16, #tpu.memory_space<vmem>>, vector<1x8x8xbf16>
    %78 = vector.shape_cast %77 : vector<1x8x8xbf16> to vector<8x8xbf16>
    %cst_80 = arith.constant dense<0.000000e+00> : vector<64x8xf32>
    %79 = tpu.matmul %76, %78, %cst_80 {dimension_numbers = #tpu.dot_dimension_numbers<[1], [0], [0], [1], [0, 0, 1, 1], [], []>} : vector<64x8xbf16>, vector<8x8xbf16>, vector<64x8xf32> -> vector<64x8xf32>
    %80 = arith.addf %74, %79 : vector<64x8xf32>
    %c0_81 = arith.constant 0 : index
    %c1_82 = arith.constant 1 : index
    %c0_83 = arith.constant 0 : index
    %81 = vector.load %arg11[%c0_81, %c1_82, %c0_83] : memref<10x10x8xbf16, #tpu.memory_space<vmem>>, vector<8x8x8xbf16>
    %82 = vector.shape_cast %81 : vector<8x8x8xbf16> to vector<64x8xbf16>
    %c1_84 = arith.constant 1 : index
    %c0_85 = arith.constant 0 : index
    %c0_86 = arith.constant 0 : index
    %83 = vector.load %arg7[%c1_84, %c0_85, %c0_86] : memref<9x8x8xbf16, #tpu.memory_space<vmem>>, vector<1x8x8xbf16>
    %84 = vector.shape_cast %83 : vector<1x8x8xbf16> to vector<8x8xbf16>
    %cst_87 = arith.constant dense<0.000000e+00> : vector<64x8xf32>
    %85 = tpu.matmul %82, %84, %cst_87 {dimension_numbers = #tpu.dot_dimension_numbers<[1], [0], [0], [1], [0, 0, 1, 1], [], []>} : vector<64x8xbf16>, vector<8x8xbf16>, vector<64x8xf32> -> vector<64x8xf32>
    %86 = arith.addf %80, %85 : vector<64x8xf32>
    %c0_88 = arith.constant 0 : index
    %c2_89 = arith.constant 2 : index
    %c0_90 = arith.constant 0 : index
    %87 = vector.load %arg11[%c0_88, %c2_89, %c0_90] : memref<10x10x8xbf16, #tpu.memory_space<vmem>>, vector<8x8x8xbf16>
    %88 = vector.shape_cast %87 : vector<8x8x8xbf16> to vector<64x8xbf16>
    %c2_91 = arith.constant 2 : index
    %c0_92 = arith.constant 0 : index
    %c0_93 = arith.constant 0 : index
    %89 = vector.load %arg7[%c2_91, %c0_92, %c0_93] : memref<9x8x8xbf16, #tpu.memory_space<vmem>>, vector<1x8x8xbf16>
    %90 = vector.shape_cast %89 : vector<1x8x8xbf16> to vector<8x8xbf16>
    %cst_94 = arith.constant dense<0.000000e+00> : vector<64x8xf32>
    %91 = tpu.matmul %88, %90, %cst_94 {dimension_numbers = #tpu.dot_dimension_numbers<[1], [0], [0], [1], [0, 0, 1, 1], [], []>} : vector<64x8xbf16>, vector<8x8xbf16>, vector<64x8xf32> -> vector<64x8xf32>
    %92 = arith.addf %86, %91 : vector<64x8xf32>
    %c1_95 = arith.constant 1 : index
    %c0_96 = arith.constant 0 : index
    %c0_97 = arith.constant 0 : index
    %93 = vector.load %arg11[%c1_95, %c0_96, %c0_97] : memref<10x10x8xbf16, #tpu.memory_space<vmem>>, vector<8x8x8xbf16>
    %94 = vector.shape_cast %93 : vector<8x8x8xbf16> to vector<64x8xbf16>
    %c3_98 = arith.constant 3 : index
    %c0_99 = arith.constant 0 : index
    %c0_100 = arith.constant 0 : index
    %95 = vector.load %arg7[%c3_98, %c0_99, %c0_100] : memref<9x8x8xbf16, #tpu.memory_space<vmem>>, vector<1x8x8xbf16>
    %96 = vector.shape_cast %95 : vector<1x8x8xbf16> to vector<8x8xbf16>
    %cst_101 = arith.constant dense<0.000000e+00> : vector<64x8xf32>
    %97 = tpu.matmul %94, %96, %cst_101 {dimension_numbers = #tpu.dot_dimension_numbers<[1], [0], [0], [1], [0, 0, 1, 1], [], []>} : vector<64x8xbf16>, vector<8x8xbf16>, vector<64x8xf32> -> vector<64x8xf32>
    %98 = arith.addf %92, %97 : vector<64x8xf32>
    %c1_102 = arith.constant 1 : index
    %c1_103 = arith.constant 1 : index
    %c0_104 = arith.constant 0 : index
    %99 = vector.load %arg11[%c1_102, %c1_103, %c0_104] : memref<10x10x8xbf16, #tpu.memory_space<vmem>>, vector<8x8x8xbf16>
    %100 = vector.shape_cast %99 : vector<8x8x8xbf16> to vector<64x8xbf16>
    %c4_105 = arith.constant 4 : index
    %c0_106 = arith.constant 0 : index
    %c0_107 = arith.constant 0 : index
    %101 = vector.load %arg7[%c4_105, %c0_106, %c0_107] : memref<9x8x8xbf16, #tpu.memory_space<vmem>>, vector<1x8x8xbf16>
    %102 = vector.shape_cast %101 : vector<1x8x8xbf16> to vector<8x8xbf16>
    %cst_108 = arith.constant dense<0.000000e+00> : vector<64x8xf32>
    %103 = tpu.matmul %100, %102, %cst_108 {dimension_numbers = #tpu.dot_dimension_numbers<[1], [0], [0], [1], [0, 0, 1, 1], [], []>} : vector<64x8xbf16>, vector<8x8xbf16>, vector<64x8xf32> -> vector<64x8xf32>
    %104 = arith.addf %98, %103 : vector<64x8xf32>
    %c1_109 = arith.constant 1 : index
    %c2_110 = arith.constant 2 : index
    %c0_111 = arith.constant 0 : index
    %105 = vector.load %arg11[%c1_109, %c2_110, %c0_111] : memref<10x10x8xbf16, #tpu.memory_space<vmem>>, vector<8x8x8xbf16>
    %106 = vector.shape_cast %105 : vector<8x8x8xbf16> to vector<64x8xbf16>
    %c5_112 = arith.constant 5 : index
    %c0_113 = arith.constant 0 : index
    %c0_114 = arith.constant 0 : index
    %107 = vector.load %arg7[%c5_112, %c0_113, %c0_114] : memref<9x8x8xbf16, #tpu.memory_space<vmem>>, vector<1x8x8xbf16>
    %108 = vector.shape_cast %107 : vector<1x8x8xbf16> to vector<8x8xbf16>
    %cst_115 = arith.constant dense<0.000000e+00> : vector<64x8xf32>
    %109 = tpu.matmul %106, %108, %cst_115 {dimension_numbers = #tpu.dot_dimension_numbers<[1], [0], [0], [1], [0, 0, 1, 1], [], []>} : vector<64x8xbf16>, vector<8x8xbf16>, vector<64x8xf32> -> vector<64x8xf32>
    %110 = arith.addf %104, %109 : vector<64x8xf32>
    %c2_116 = arith.constant 2 : index
    %c0_117 = arith.constant 0 : index
    %c0_118 = arith.constant 0 : index
    %111 = vector.load %arg11[%c2_116, %c0_117, %c0_118] : memref<10x10x8xbf16, #tpu.memory_space<vmem>>, vector<8x8x8xbf16>
    %112 = vector.shape_cast %111 : vector<8x8x8xbf16> to vector<64x8xbf16>
    %c6_119 = arith.constant 6 : index
    %c0_120 = arith.constant 0 : index
    %c0_121 = arith.constant 0 : index
    %113 = vector.load %arg7[%c6_119, %c0_120, %c0_121] : memref<9x8x8xbf16, #tpu.memory_space<vmem>>, vector<1x8x8xbf16>
    %114 = vector.shape_cast %113 : vector<1x8x8xbf16> to vector<8x8xbf16>
    %cst_122 = arith.constant dense<0.000000e+00> : vector<64x8xf32>
    %115 = tpu.matmul %112, %114, %cst_122 {dimension_numbers = #tpu.dot_dimension_numbers<[1], [0], [0], [1], [0, 0, 1, 1], [], []>} : vector<64x8xbf16>, vector<8x8xbf16>, vector<64x8xf32> -> vector<64x8xf32>
    %116 = arith.addf %110, %115 : vector<64x8xf32>
    %c2_123 = arith.constant 2 : index
    %c1_124 = arith.constant 1 : index
    %c0_125 = arith.constant 0 : index
    %117 = vector.load %arg11[%c2_123, %c1_124, %c0_125] : memref<10x10x8xbf16, #tpu.memory_space<vmem>>, vector<8x8x8xbf16>
    %118 = vector.shape_cast %117 : vector<8x8x8xbf16> to vector<64x8xbf16>
    %c7_126 = arith.constant 7 : index
    %c0_127 = arith.constant 0 : index
    %c0_128 = arith.constant 0 : index
    %119 = vector.load %arg7[%c7_126, %c0_127, %c0_128] : memref<9x8x8xbf16, #tpu.memory_space<vmem>>, vector<1x8x8xbf16>
    %120 = vector.shape_cast %119 : vector<1x8x8xbf16> to vector<8x8xbf16>
    %cst_129 = arith.constant dense<0.000000e+00> : vector<64x8xf32>
    %121 = tpu.matmul %118, %120, %cst_129 {dimension_numbers = #tpu.dot_dimension_numbers<[1], [0], [0], [1], [0, 0, 1, 1], [], []>} : vector<64x8xbf16>, vector<8x8xbf16>, vector<64x8xf32> -> vector<64x8xf32>
    %122 = arith.addf %116, %121 : vector<64x8xf32>
    %c2_130 = arith.constant 2 : index
    %c2_131 = arith.constant 2 : index
    %c0_132 = arith.constant 0 : index
    %123 = vector.load %arg11[%c2_130, %c2_131, %c0_132] : memref<10x10x8xbf16, #tpu.memory_space<vmem>>, vector<8x8x8xbf16>
    %124 = vector.shape_cast %123 : vector<8x8x8xbf16> to vector<64x8xbf16>
    %c8_133 = arith.constant 8 : index
    %c0_134 = arith.constant 0 : index
    %c0_135 = arith.constant 0 : index
    %125 = vector.load %arg7[%c8_133, %c0_134, %c0_135] : memref<9x8x8xbf16, #tpu.memory_space<vmem>>, vector<1x8x8xbf16>
    %126 = vector.shape_cast %125 : vector<1x8x8xbf16> to vector<8x8xbf16>
    %cst_136 = arith.constant dense<0.000000e+00> : vector<64x8xf32>
    %127 = tpu.matmul %124, %126, %cst_136 {dimension_numbers = #tpu.dot_dimension_numbers<[1], [0], [0], [1], [0, 0, 1, 1], [], []>} : vector<64x8xbf16>, vector<8x8xbf16>, vector<64x8xf32> -> vector<64x8xf32>
    %128 = arith.addf %122, %127 : vector<64x8xf32>
    %c0_137 = arith.constant 0 : index
    %c0_138 = arith.constant 0 : index
    %c0_139 = arith.constant 0 : index
    %c0_140 = arith.constant 0 : index
    %129 = vector.load %arg4[%c0_137, %c0_138, %c0_139, %c0_140] : memref<1x9x9x4xbf16, #tpu.memory_space<vmem>>, vector<1x8x8x4xbf16>
    %130 = vector.shape_cast %129 : vector<1x8x8x4xbf16> to vector<8x8x4xbf16>
    %131 = vector.shape_cast %130 : vector<8x8x4xbf16> to vector<64x4xbf16>
    %c0_141 = arith.constant 0 : index
    %c0_142 = arith.constant 0 : index
    %132 = vector.load %arg9[%c0_141, %c0_142] : memref<4x8xbf16, #tpu.memory_space<vmem>>, vector<4x8xbf16>
    %cst_143 = arith.constant dense<0.000000e+00> : vector<64x8xf32>
    %133 = tpu.matmul %131, %132, %cst_143 {dimension_numbers = #tpu.dot_dimension_numbers<[1], [0], [0], [1], [0, 0, 1, 1], [], []>} : vector<64x4xbf16>, vector<4x8xbf16>, vector<64x8xf32> -> vector<64x8xf32>
    %134 = arith.addf %128, %133 : vector<64x8xf32>
    %c0_144 = arith.constant 0 : index
    %c0_145 = arith.constant 0 : index
    %135 = vector.load %arg8[%c0_144, %c0_145] : memref<1x8xf32, #tpu.memory_space<vmem>>, vector<1x8xf32>
    %136 = vector.broadcast %135 : vector<1x8xf32> to vector<64x8xf32>
    %137 = arith.addf %134, %136 : vector<64x8xf32>
    %cst_146 = arith.constant 0.000000e+00 : f32
    %138 = vector.broadcast %cst_146 : f32 to vector<64x8xf32>
    %139 = arith.maximumf %137, %138 : vector<64x8xf32>
    %140 = arith.truncf %139 : vector<64x8xf32> to vector<64x8xbf16>
    %141 = vector.shape_cast %140 : vector<64x8xbf16> to vector<8x8x8xbf16>
    %c0_147 = arith.constant 0 : index
    %c0_148 = arith.constant 0 : index
    %c0_149 = arith.constant 0 : index
    %c0_150 = arith.constant 0 : index
    %142 = vector.load %arg10[%c0_147, %c0_148, %c0_149, %c0_150] : memref<1x8x8x8xbf16, #tpu.memory_space<vmem>>, vector<1x8x8x8xbf16>
    %143 = vector.shape_cast %142 : vector<1x8x8x8xbf16> to vector<8x8x8xbf16>
    %144 = vector.shape_cast %141 : vector<8x8x8xbf16> to vector<1x8x8x8xbf16>
    tpu.vector_store %arg10[%c0_147, %c0_148, %c0_149, %c0_150], %144 {strides = array<i32>} : memref<1x8x8x8xbf16, #tpu.memory_space<vmem>>, vector<1x8x8x8xbf16>,
    return
  }
  func.func @transform_0(%arg0: i32) -> (i32, i32, i32, i32) {
    %c0_i32 = arith.constant 0 : i32
    %c0_i32_0 = arith.constant 0 : i32
    %c0_i32_1 = arith.constant 0 : i32
    %c0_i32_2 = arith.constant 0 : i32
    return %arg0, %c0_i32, %c0_i32_0, %c0_i32_1 : i32, i32, i32, i32
  }
  func.func @transform_1(%arg0: i32) -> (i32, i32, i32, i32) {
    %c0_i32 = arith.constant 0 : i32
    %c0_i32_0 = arith.constant 0 : i32
    %c0_i32_1 = arith.constant 0 : i32
    %c0_i32_2 = arith.constant 0 : i32
    return %arg0, %c0_i32, %c0_i32_0, %c0_i32_1 : i32, i32, i32, i32
  }
  func.func @transform_2(%arg0: i32) -> (i32, i32, i32, i32) {
    %c0_i32 = arith.constant 0 : i32
    %c0_i32_0 = arith.constant 0 : i32
    %c0_i32_1 = arith.constant 0 : i32
    %c0_i32_2 = arith.constant 0 : i32
    return %arg0, %c0_i32, %c0_i32_0, %c0_i32_1 : i32, i32, i32, i32
  }
  func.func @transform_3(%arg0: i32) -> (i32, i32, i32, i32) {
    %c0_i32 = arith.constant 0 : i32
    %c0_i32_0 = arith.constant 0 : i32
    %c0_i32_1 = arith.constant 0 : i32
    %c0_i32_2 = arith.constant 0 : i32
    return %arg0, %c0_i32, %c0_i32_0, %c0_i32_1 : i32, i32, i32, i32
  }
  func.func @transform_4(%arg0: i32) -> (i32, i32, i32) {
    %c0_i32 = arith.constant 0 : i32
    %c0_i32_0 = arith.constant 0 : i32
    %c0_i32_1 = arith.constant 0 : i32
    %c0_i32_2 = arith.constant 0 : i32
    return %c0_i32, %c0_i32_0, %c0_i32_1 : i32, i32, i32
  }
  func.func @transform_5(%arg0: i32) -> (i32, i32) {
    %c0_i32 = arith.constant 0 : i32
    %c0_i32_0 = arith.constant 0 : i32
    %c0_i32_1 = arith.constant 0 : i32
    return %c0_i32, %c0_i32_0 : i32, i32
  }
  func.func @transform_6(%arg0: i32) -> (i32, i32, i32) {
    %c0_i32 = arith.constant 0 : i32
    %c0_i32_0 = arith.constant 0 : i32
    %c0_i32_1 = arith.constant 0 : i32
    %c0_i32_2 = arith.constant 0 : i32
    return %c0_i32, %c0_i32_0, %c0_i32_1 : i32, i32, i32
  }
  func.func @transform_7(%arg0: i32) -> (i32, i32) {
    %c0_i32 = arith.constant 0 : i32
    %c0_i32_0 = arith.constant 0 : i32
    %c0_i32_1 = arith.constant 0 : i32
    return %c0_i32, %c0_i32_0 : i32, i32
  }
  func.func @transform_8(%arg0: i32) -> (i32, i32) {
    %c0_i32 = arith.constant 0 : i32
    %c0_i32_0 = arith.constant 0 : i32
    %c0_i32_1 = arith.constant 0 : i32
    return %c0_i32, %c0_i32_0 : i32, i32
  }
  func.func @transform_9(%arg0: i32) -> (i32, i32, i32, i32) {
    %c0_i32 = arith.constant 0 : i32
    %c0_i32_0 = arith.constant 0 : i32
    %c0_i32_1 = arith.constant 0 : i32
    %c0_i32_2 = arith.constant 0 : i32
    return %arg0, %c0_i32, %c0_i32_0, %c0_i32_1 : i32, i32, i32, i32
  }
}

</mosaic_0001>

<llo_original>
// kernel: basic_block_forward.1
$region0: #{basic_block_forward.1}
  #allocation0 [shape = 'u32[]', space=smem, size = 0x4, offset = 0x4, fixed_abs, tag = 'smem constant byte address 0x4 - core index']
  #allocation1 [shape = 'u32[72,128]{1,0:T(1,128)}', space=vmem, size = 0x9000, scoped, tag = 'internal scratch']
  #allocation2 [shape = 'bf16[10,10,8]{2,1,0:T(8,128)(2,1)}', space=vmem, size = 0xa000, scoped, tag = 'scratch operand']
  %s0 = inlined_call_operand.vmem [shape: bf16[2,9,9,4], index: 0, kind: input, shape index: {}]
  %s1 = inlined_call_operand.vmem [shape: bf16[2,9,9,4], index: 1, kind: input, shape index: {}]
  %s2 = inlined_call_operand.vmem [shape: bf16[2,9,9,4], index: 2, kind: input, shape index: {}]
  %s3 = inlined_call_operand.vmem [shape: bf16[2,9,9,4], index: 3, kind: input, shape index: {}]
  %s4 = inlined_call_operand.vmem [shape: bf16[9,4,8], index: 4, kind: input, shape index: {}]
  %s5 = inlined_call_operand.vmem [shape: f32[1,8], index: 5, kind: input, shape index: {}]
  %s6 = inlined_call_operand.vmem [shape: bf16[9,8,8], index: 6, kind: input, shape index: {}]
  %s7 = inlined_call_operand.vmem [shape: f32[1,8], index: 7, kind: input, shape index: {}]
  %s8 = inlined_call_operand.vmem [shape: bf16[4,8], index: 8, kind: input, shape index: {}]
  %s9 = inlined_call_operand.vmem [shape: bf16[2,8,8,8], index: 9, kind: output, shape index: {}]
  %s10 = sld [smem:[#allocation0]]
  $region69: #{basic_block_forward.1} parent=0
    _
  %s12 = ssub.s32 1, %s10
  %s13 = scalar_select 0, %s12, %s10
  loop: start=0, step=1, limit=4
  $region2: #{basic_block_forward.1} parent=0 // loop_pre_header
    _
  $region3: #{basic_block_forward.1} parent=0 // loop_header
    %s15 = sphi 0, %s19
    %p16 = scmp.ge.s32.totalorder %s15, 4
    %s25 = sphi 0, %s27
    %s28 = sphi 0, %s25
    %s29 = sphi 0, %s28
    %s45 = sphi 0, %s29
    %s51 = sphi 0, %s53
    %s54 = sphi 0, %s51
    %s55 = sphi 0, %s54
    %s71 = sphi 0, %s55
    %s77 = sphi 0, %s79
    %s80 = sphi 0, %s77
    %s81 = sphi 0, %s80
    %s97 = sphi 0, %s81
    %s103 = sphi 0, %s105
    %s106 = sphi 0, %s103
    %s107 = sphi 0, %s106
    %s123 = sphi 0, %s107
    %s127 = sphi 0, %s127
    %s129 = sphi 0, %s127
    %s130 = sphi 0, %s129
    %s144 = sphi 0, %s130
    %s148 = sphi 0, %s148
    %s150 = sphi 0, %s148
    %s151 = sphi 0, %s150
    %s165 = sphi 0, %s151
    %s169 = sphi 0, %s169
    %s171 = sphi 0, %s169
    %s172 = sphi 0, %s171
    %s186 = sphi 0, %s172
    %s190 = sphi 0, %s190
    %s192 = sphi 0, %s190
    %s193 = sphi 0, %s192
    %s207 = sphi 0, %s193
    %s211 = sphi 0, %s211
    %s213 = sphi 0, %s211
    %s214 = sphi 0, %s213
    %s228 = sphi 0, %s214
    %s234 = sphi 0, %s236
    %s237 = sphi 0, %s234
    %s238 = sphi 0, %s237
    %s254 = sphi 0, %s238
  $region4: #{basic_block_forward.1} parent=0 // loop_header_branch
    %18 = sbr.rel (%p16) target = $region8
  $region5: #{basic_block_forward.1} parent=0 // loop_body
    %s20 = ssub.s32 %s15, 1
    %s21 = ssub.s32 %s15, 2
    %s22 = sadd.s32 %s15, 1
    %s23 = ssub.s32 %s15, %s22
    %p24 = scmp.eq.s32.totalorder %s23, 0
    %s26 = sadd.s32 %s25, 1
    %s27 = scalar_select %p24, %s25, %s26
    %p30 = pneg %p24
    %p31 = scmp.eq.s32.totalorder %s15, 1
    %p32 = por %p30, %p31
    %p33 = scmp.ne.s32.totalorder %s25, %s28
    %p34 = scmp.eq.s32.totalorder %s15, 0
    %p35 = por %p33, %p34
    %p36 = scmp.ne.s32.totalorder %s25, %s28
    %p37 = scmp.eq.s32.totalorder %s20, 1
    %p38 = por %p36, %p37
    %p39 = scmp.ne.s32.totalorder %s28, %s29
    %p40 = scmp.eq.s32.totalorder %s20, 0
    %p41 = por %p39, %p40
    %p42 = scmp.ne.s32.totalorder %s28, %s29
    %p43 = scmp.eq.s32.totalorder %s21, 1
    %p44 = por %p42, %p43
    %p46 = scmp.ne.s32.totalorder %s29, %s45
    %p47 = scmp.eq.s32.totalorder %s21, 0
    %p48 = por %p46, %p47
    %s49 = ssub.s32 %s15, %s22
    %p50 = scmp.eq.s32.totalorder %s49, 0
    %s52 = sadd.s32 %s51, 1
    %s53 = scalar_select %p50, %s51, %s52
    %p56 = pneg %p50
    %p57 = scmp.eq.s32.totalorder %s15, 1
    %p58 = por %p56, %p57
    %p59 = scmp.ne.s32.totalorder %s51, %s54
    %p60 = scmp.eq.s32.totalorder %s15, 0
    %p61 = por %p59, %p60
    %p62 = scmp.ne.s32.totalorder %s51, %s54
    %p63 = scmp.eq.s32.totalorder %s20, 1
    %p64 = por %p62, %p63
    %p65 = scmp.ne.s32.totalorder %s54, %s55
    %p66 = scmp.eq.s32.totalorder %s20, 0
    %p67 = por %p65, %p66
    %p68 = scmp.ne.s32.totalorder %s54, %s55
    %p69 = scmp.eq.s32.totalorder %s21, 1
    %p70 = por %p68, %p69
    %p72 = scmp.ne.s32.totalorder %s55, %s71
    %p73 = scmp.eq.s32.totalorder %s21, 0
    %p74 = por %p72, %p73
    %s75 = ssub.s32 %s15, %s22
    %p76 = scmp.eq.s32.totalorder %s75, 0
    %s78 = sadd.s32 %s77, 1
    %s79 = scalar_select %p76, %s77, %s78
    %p82 = pneg %p76
    %p83 = scmp.eq.s32.totalorder %s15, 1
    %p84 = por %p82, %p83
    %p85 = scmp.ne.s32.totalorder %s77, %s80
    %p86 = scmp.eq.s32.totalorder %s15, 0
    %p87 = por %p85, %p86
    %p88 = scmp.ne.s32.totalorder %s77, %s80
    %p89 = scmp.eq.s32.totalorder %s20, 1
    %p90 = por %p88, %p89
    %p91 = scmp.ne.s32.totalorder %s80, %s81
    %p92 = scmp.eq.s32.totalorder %s20, 0
    %p93 = por %p91, %p92
    %p94 = scmp.ne.s32.totalorder %s80, %s81
    %p95 = scmp.eq.s32.totalorder %s21, 1
    %p96 = por %p94, %p95
    %p98 = scmp.ne.s32.totalorder %s81, %s97
    %p99 = scmp.eq.s32.totalorder %s21, 0
    %p100 = por %p98, %p99
    %s101 = ssub.s32 %s15, %s22
    %p102 = scmp.eq.s32.totalorder %s101, 0
    %s104 = sadd.s32 %s103, 1
    %s105 = scalar_select %p102, %s103, %s104
    %p108 = pneg %p102
    %p109 = scmp.eq.s32.totalorder %s15, 1
    %p110 = por %p108, %p109
    %p111 = scmp.ne.s32.totalorder %s103, %s106
    %p112 = scmp.eq.s32.totalorder %s15, 0
    %p113 = por %p111, %p112
    %p114 = scmp.ne.s32.totalorder %s103, %s106
    %p115 = scmp.eq.s32.totalorder %s20, 1
    %p116 = por %p114, %p115
    %p117 = scmp.ne.s32.totalorder %s106, %s107
    %p118 = scmp.eq.s32.totalorder %s20, 0
    %p119 = por %p117, %p118
    %p120 = scmp.ne.s32.totalorder %s106, %s107
    %p121 = scmp.eq.s32.totalorder %s21, 1
    %p122 = por %p120, %p121
    %p124 = scmp.ne.s32.totalorder %s107, %s123
    %p125 = scmp.eq.s32.totalorder %s21, 0
    %p126 = por %p124, %p125
    %s128 = sadd.s32 %s127, 1
    %p131 = scmp.eq.s32.totalorder %s15, 1
    %p132 = scmp.ne.s32.totalorder %s127, %s129
    %p133 = scmp.eq.s32.totalorder %s15, 0
    %p134 = por %p132, %p133
    %p135 = scmp.ne.s32.totalorder %s127, %s129
    %p136 = scmp.eq.s32.totalorder %s20, 1
    %p137 = por %p135, %p136
    %p138 = scmp.ne.s32.totalorder %s129, %s130
    %p139 = scmp.eq.s32.totalorder %s20, 0
    %p140 = por %p138, %p139
    %p141 = scmp.ne.s32.totalorder %s129, %s130
    %p142 = scmp.eq.s32.totalorder %s21, 1
    %p143 = por %p141, %p142
    %p145 = scmp.ne.s32.totalorder %s130, %s144
    %p146 = scmp.eq.s32.totalorder %s21, 0
    %p147 = por %p145, %p146
    %s149 = sadd.s32 %s148, 1
    %p152 = scmp.eq.s32.totalorder %s15, 1
    %p153 = scmp.ne.s32.totalorder %s148, %s150
    %p154 = scmp.eq.s32.totalorder %s15, 0
    %p155 = por %p153, %p154
    %p156 = scmp.ne.s32.totalorder %s148, %s150
    %p157 = scmp.eq.s32.totalorder %s20, 1
    %p158 = por %p156, %p157
    %p159 = scmp.ne.s32.totalorder %s150, %s151
    %p160 = scmp.eq.s32.totalorder %s20, 0
    %p161 = por %p159, %p160
    %p162 = scmp.ne.s32.totalorder %s150, %s151
    %p163 = scmp.eq.s32.totalorder %s21, 1
    %p164 = por %p162, %p163
    %p166 = scmp.ne.s32.totalorder %s151, %s165
    %p167 = scmp.eq.s32.totalorder %s21, 0
    %p168 = por %p166, %p167
    %s170 = sadd.s32 %s169, 1
    %p173 = scmp.eq.s32.totalorder %s15, 1
    %p174 = scmp.ne.s32.totalorder %s169, %s171
    %p175 = scmp.eq.s32.totalorder %s15, 0
    %p176 = por %p174, %p175
    %p177 = scmp.ne.s32.totalorder %s169, %s171
    %p178 = scmp.eq.s32.totalorder %s20, 1
    %p179 = por %p177, %p178
    %p180 = scmp.ne.s32.totalorder %s171, %s172
    %p181 = scmp.eq.s32.totalorder %s20, 0
    %p182 = por %p180, %p181
    %p183 = scmp.ne.s32.totalorder %s171, %s172
    %p184 = scmp.eq.s32.totalorder %s21, 1
    %p185 = por %p183, %p184
    %p187 = scmp.ne.s32.totalorder %s172, %s186
    %p188 = scmp.eq.s32.totalorder %s21, 0
    %p189 = por %p187, %p188
    %s191 = sadd.s32 %s190, 1
    %p194 = scmp.eq.s32.totalorder %s15, 1
    %p195 = scmp.ne.s32.totalorder %s190, %s192
    %p196 = scmp.eq.s32.totalorder %s15, 0
    %p197 = por %p195, %p196
    %p198 = scmp.ne.s32.totalorder %s190, %s192
    %p199 = scmp.eq.s32.totalorder %s20, 1
    %p200 = por %p198, %p199
    %p201 = scmp.ne.s32.totalorder %s192, %s193
    %p202 = scmp.eq.s32.totalorder %s20, 0
    %p203 = por %p201, %p202
    %p204 = scmp.ne.s32.totalorder %s192, %s193
    %p205 = scmp.eq.s32.totalorder %s21, 1
    %p206 = por %p204, %p205
    %p208 = scmp.ne.s32.totalorder %s193, %s207
    %p209 = scmp.eq.s32.totalorder %s21, 0
    %p210 = por %p208, %p209
    %s212 = sadd.s32 %s211, 1
    %p215 = scmp.eq.s32.totalorder %s15, 1
    %p216 = scmp.ne.s32.totalorder %s211, %s213
    %p217 = scmp.eq.s32.totalorder %s15, 0
    %p218 = por %p216, %p217
    %p219 = scmp.ne.s32.totalorder %s211, %s213
    %p220 = scmp.eq.s32.totalorder %s20, 1
    %p221 = por %p219, %p220
    %p222 = scmp.ne.s32.totalorder %s213, %s214
    %p223 = scmp.eq.s32.totalorder %s20, 0
    %p224 = por %p222, %p223
    %p225 = scmp.ne.s32.totalorder %s213, %s214
    %p226 = scmp.eq.s32.totalorder %s21, 1
    %p227 = por %p225, %p226
    %p229 = scmp.ne.s32.totalorder %s214, %s228
    %p230 = scmp.eq.s32.totalorder %s21, 0
    %p231 = por %p229, %p230
    %s232 = ssub.s32 %s15, %s22
    %p233 = scmp.eq.s32.totalorder %s232, 0
    %s235 = sadd.s32 %s234, 1
    %s236 = scalar_select %p233, %s234, %s235
    %p239 = pneg %p233
    %p240 = scmp.eq.s32.totalorder %s15, 1
    %p241 = por %p239, %p240
    %p242 = scmp.ne.s32.totalorder %s234, %s237
    %p243 = scmp.eq.s32.totalorder %s15, 0
    %p244 = por %p242, %p243
    %p245 = scmp.ne.s32.totalorder %s234, %s237
    %p246 = scmp.eq.s32.totalorder %s20, 1
    %p247 = por %p245, %p246
    %p248 = scmp.ne.s32.totalorder %s237, %s238
    %p249 = scmp.eq.s32.totalorder %s20, 0
    %p250 = por %p248, %p249
    %p251 = scmp.ne.s32.totalorder %s237, %s238
    %p252 = scmp.eq.s32.totalorder %s21, 1
    %p253 = por %p251, %p252
    %p255 = scmp.ne.s32.totalorder %s238, %s254
    %p256 = scmp.eq.s32.totalorder %s21, 0
    %p257 = por %p255, %p256
    %p258 = scmp.le.s32.totalorder 1, %s15
    %p259 = scmp.lt.s32.totalorder %s15, 3
    %p260 = pnand %p258, %p259
    %p261 = pneg %p260
    // Predicated region
    $region9: #{basic_block_forward.1} parent=5 // pred_check
      _
    $region10: #{basic_block_forward.1} parent=5 // pred_check_branch
      %263 = sbr.rel (%p260) target = $region12
    $region11: #{basic_block_forward.1} parent=5 // pred_region
      %s264 = ssub.s32 %s15, 1
      // Predicated region
      $region13: #{basic_block_forward.1} parent=11 // pred_check
        %p265 = pneg %p140
      $region14: #{basic_block_forward.1} parent=11 // pred_check_branch
        %267 = sbr.rel (%p265) target = $region16
      $region15: #{basic_block_forward.1} parent=11 // pred_region
        _
      $region16: #{basic_block_forward.1} parent=11 // pred_fallthru
        _
      // Predicated region
      $region17: #{basic_block_forward.1} parent=11 // pred_check
        %p268 = pneg %p161
      $region18: #{basic_block_forward.1} parent=11 // pred_check_branch
        %270 = sbr.rel (%p268) target = $region20
      $region19: #{basic_block_forward.1} parent=11 // pred_region
        _
      $region20: #{basic_block_forward.1} parent=11 // pred_fallthru
        _
      // Predicated region
      $region21: #{basic_block_forward.1} parent=11 // pred_check
        %p271 = pneg %p182
      $region22: #{basic_block_forward.1} parent=11 // pred_check_branch
        %273 = sbr.rel (%p271) target = $region24
      $region23: #{basic_block_forward.1} parent=11 // pred_region
        _
      $region24: #{basic_block_forward.1} parent=11 // pred_fallthru
        _
      // Predicated region
      $region25: #{basic_block_forward.1} parent=11 // pred_check
        %p274 = pneg %p203
      $region26: #{basic_block_forward.1} parent=11 // pred_check_branch
        %276 = sbr.rel (%p274) target = $region28
      $region27: #{basic_block_forward.1} parent=11 // pred_region
        _
      $region28: #{basic_block_forward.1} parent=11 // pred_fallthru
        _
      // Predicated region
      $region29: #{basic_block_forward.1} parent=11 // pred_check
        %p277 = pneg %p224
      $region30: #{basic_block_forward.1} parent=11 // pred_check_branch
        %279 = sbr.rel (%p277) target = $region32
      $region31: #{basic_block_forward.1} parent=11 // pred_region
        _
      $region32: #{basic_block_forward.1} parent=11 // pred_fallthru
        _
    $region12: #{basic_block_forward.1} parent=5 // pred_fallthru
      _
    %p280 = scmp.lt.s32.totalorder %s15, 2
    // Predicated region
    $region33: #{basic_block_forward.1} parent=5 // pred_check
      %p281 = pneg %p280
    $region34: #{basic_block_forward.1} parent=5 // pred_check_branch
      %283 = sbr.rel (%p281) target = $region36
    $region35: #{basic_block_forward.1} parent=5 // pred_region
      // Predicated region
      $region37: #{basic_block_forward.1} parent=35 // pred_check
        %p284 = pneg %p35
      $region38: #{basic_block_forward.1} parent=35 // pred_check_branch
        %286 = sbr.rel (%p284) target = $region40
      $region39: #{basic_block_forward.1} parent=35 // pred_region
        %p287 = scmp.lt.s32.totalorder %s15, 1
        %s288 = scalar_select %p287, %s15, 1
        %s289 = smul.addr %s288, 18
        %s290 = smul.addr %s289, 4
        %s291 = scalar_lea.vmem %s0, %s290
      $region40: #{basic_block_forward.1} parent=35 // pred_fallthru
        _
      // Predicated region
      $region41: #{basic_block_forward.1} parent=35 // pred_check
        %p292 = pneg %p61
      $region42: #{basic_block_forward.1} parent=35 // pred_check_branch
        %294 = sbr.rel (%p292) target = $region44
      $region43: #{basic_block_forward.1} parent=35 // pred_region
        %p295 = scmp.lt.s32.totalorder %s15, 1
        %s296 = scalar_select %p295, %s15, 1
        %s297 = smul.addr %s296, 18
        %s298 = smul.addr %s297, 4
        %s299 = scalar_lea.vmem %s1, %s298
      $region44: #{basic_block_forward.1} parent=35 // pred_fallthru
        _
      // Predicated region
      $region45: #{basic_block_forward.1} parent=35 // pred_check
        %p300 = pneg %p87
      $region46: #{basic_block_forward.1} parent=35 // pred_check_branch
        %302 = sbr.rel (%p300) target = $region48
      $region47: #{basic_block_forward.1} parent=35 // pred_region
        %p303 = scmp.lt.s32.totalorder %s15, 1
        %s304 = scalar_select %p303, %s15, 1
        %s305 = smul.addr %s304, 18
        %s306 = smul.addr %s305, 4
        %s307 = scalar_lea.vmem %s2, %s306
      $region48: #{basic_block_forward.1} parent=35 // pred_fallthru
        _
      // Predicated region
      $region49: #{basic_block_forward.1} parent=35 // pred_check
        %p308 = pneg %p113
      $region50: #{basic_block_forward.1} parent=35 // pred_check_branch
        %310 = sbr.rel (%p308) target = $region52
      $region51: #{basic_block_forward.1} parent=35 // pred_region
        %p311 = scmp.lt.s32.totalorder %s15, 1
        %s312 = scalar_select %p311, %s15, 1
        %s313 = smul.addr %s312, 18
        %s314 = smul.addr %s313, 4
        %s315 = scalar_lea.vmem %s3, %s314
      $region52: #{basic_block_forward.1} parent=35 // pred_fallthru
        _
    $region36: #{basic_block_forward.1} parent=5 // pred_fallthru
      _
    %p316 = scmp.le.s32.totalorder 1, %s15
    %p317 = scmp.lt.s32.totalorder %s15, 3
    %p318 = pnand %p316, %p317
    %p319 = pneg %p318
    // Predicated region
    $region53: #{basic_block_forward.1} parent=5 // pred_check
      _
    $region54: #{basic_block_forward.1} parent=5 // pred_check_branch
      %321 = sbr.rel (%p318) target = $region56
    $region55: #{basic_block_forward.1} parent=5 // pred_region
      %s322 = ssub.s32 %s15, 1
      %p323 = scmp.lt.s32.totalorder %s20, 1
      %s324 = scalar_select %p323, %s20, 1
      %s325 = smul.addr %s324, 18
      %s326 = smul.addr %s325, 4
      %s327 = scalar_lea.vmem %s0, %s326
      %p328 = pneg %p41
      %p329 = pneg %p38
      %p330 = scmp.lt.s32.totalorder %s20, 1
      %s331 = scalar_select %p330, %s20, 1
      %s332 = smul.addr %s331, 18
      %s333 = smul.addr %s332, 4
      %s334 = scalar_lea.vmem %s1, %s333
      %p335 = pneg %p67
      %p336 = pneg %p64
      %p337 = scmp.lt.s32.totalorder %s20, 1
      %s338 = scalar_select %p337, %s20, 1
      %s339 = smul.addr %s338, 18
      %s340 = smul.addr %s339, 4
      %s341 = scalar_lea.vmem %s2, %s340
      %p342 = pneg %p93
      %p343 = pneg %p90
      %p344 = scmp.lt.s32.totalorder %s20, 1
      %s345 = scalar_select %p344, %s20, 1
      %s346 = smul.addr %s345, 18
      %s347 = smul.addr %s346, 4
      %s348 = scalar_lea.vmem %s3, %s347
      %p349 = pneg %p119
      %p350 = pneg %p116
      %p351 = pneg %p140
      %p352 = pneg %p137
      %p353 = pneg %p161
      %p354 = pneg %p158
      %p355 = pneg %p182
      %p356 = pneg %p179
      %p357 = pneg %p203
      %p358 = pneg %p200
      %p359 = pneg %p224
      %p360 = pneg %p221
      %p361 = pneg %p250
      %p362 = pneg %p247
      %p363 = scmp.lt.s32.totalorder %s20, 1
      %s364 = scalar_select %p363, %s20, 1
      %s365 = smul.addr %s364, 8
      %s366 = smul.addr %s365, 4
      %s367 = scalar_lea.vmem %s9, %s366
      %p368 = scmp.lt.s32.totalorder %s20, 1
      %s369 = scalar_select %p368, %s20, 1
      %s370 = smul.addr %s369, 18
      %s371 = smul.addr %s370, 4
      %s372 = scalar_lea.vmem %s0, %s371
      %p373 = scmp.lt.s32.totalorder %s20, 1
      %s374 = scalar_select %p373, %s20, 1
      %s375 = smul.addr %s374, 18
      %s376 = smul.addr %s375, 4
      %s377 = scalar_lea.vmem %s1, %s376
      %p378 = scmp.lt.s32.totalorder %s20, 1
      %s379 = scalar_select %p378, %s20, 1
      %s380 = smul.addr %s379, 18
      %s381 = smul.addr %s380, 4
      %s382 = scalar_lea.vmem %s2, %s381
      %p383 = scmp.lt.s32.totalorder %s20, 1
      %s384 = scalar_select %p383, %s20, 1
      %s385 = smul.addr %s384, 18
      %s386 = smul.addr %s385, 4
      %s387 = scalar_lea.vmem %s3, %s386
      %p388 = scmp.lt.s32.totalorder %s20, 1
      %s389 = scalar_select %p388, %s20, 1
      %s390 = smul.addr %s389, 8
      %s391 = smul.addr %s390, 4
      %s392 = scalar_lea.vmem %s9, %s391
      %v394 = vld [vmem:[%s372] sm:$0xf]
      %v395 = vld [vmem:[%s372 + $0x8] sm:$0xf]
      %v396 = vld [vmem:[%s372 + $0x10] sm:$0xf]
      %v397 = vld [vmem:[%s372 + $0x18] sm:$0xf]
      %v398 = vld [vmem:[%s372 + $0x20] sm:$0xf]
      %v399 = vld [vmem:[%s372 + $0x28] sm:$0xf]
      %v400 = vld [vmem:[%s372 + $0x30] sm:$0xf]
      %v401 = vld [vmem:[%s372 + $0x38] sm:$0xf]
      %v402 = vld [vmem:[%s4] sm:$0x3]
      %v403 = vld [vmem:[%s377] sm:$0xf]
      %v404 = vld [vmem:[%s377 + $0x8] sm:$0xf]
      %v405 = vld [vmem:[%s377 + $0x10] sm:$0xf]
      %v406 = vld [vmem:[%s377 + $0x18] sm:$0xf]
      %v407 = vld [vmem:[%s377 + $0x20] sm:$0xf]
      %v408 = vld [vmem:[%s377 + $0x28] sm:$0xf]
      %v409 = vld [vmem:[%s377 + $0x30] sm:$0xf]
      %v410 = vld [vmem:[%s377 + $0x38] sm:$0xf]
      %s411 = scalar_lea.vmem %s4, 2
      %v412 = vld [vmem:[%s411] sm:$0x3]
      %v421 = vunpack.c.l.b16 %v403
      %v422 = vunpack.c.l.b16 %v404
      %v423 = vunpack.c.l.b16 %v405
      %v424 = vunpack.c.l.b16 %v406
      %v425 = vunpack.c.l.b16 %v407
      %v426 = vunpack.c.l.b16 %v408
      %v427 = vunpack.c.l.b16 %v409
      %v428 = vunpack.c.l.b16 %v410
      %v429 = vpack.c.b16 %v422, %v421
      %v430 = vpack.c.b16 %v424, %v423
      %v431 = vpack.c.b16 %v426, %v425
      %v432 = vpack.c.b16 %v428, %v427
      %vm433 = vcmask 31744
      %v435 = vsel %vm433, %v429, 0
      %v438 = vsel %vm433, %v430, 0
      %v441 = vsel %vm433, %v431, 0
      %v444 = vsel %vm433, %v432, 0
      %vm446 = vcmask 1041408
      %v448 = vsel %vm446, %v412, 0
      %450 = vmatpush.bf16.msra.mxu0 0
      %451 = vmatpush.bf16.msra.mxu0 0
      %452 = vmatpush.bf16.msra.mxu0 0
      %453 = vmatpush.bf16.msra.mxu0 0
      %454 = vmatpush.bf16.msra.mxu0 0
      %455 = vmatpush.bf16.msra.mxu0 0
      %456 = vmatpush.bf16.msra.mxu0 0
      %457 = vmatpush.bf16.msra.mxu0 %v448
      %458 = vmatmul.bf16.gmra.mxu0 %v435
      %v459 = vpop.f32.mrf.mxu0
      %v460 = vadd.f32 0.0, %v459
      %v461 = vpop.f32.mrf.mxu0
      %v462 = vadd.f32 0.0, %v461
      %463 = vmatmul.bf16.gmra.mxu0 %v438
      %v464 = vpop.f32.mrf.mxu0
      %v465 = vadd.f32 0.0, %v464
      %v466 = vpop.f32.mrf.mxu0
      %v467 = vadd.f32 0.0, %v466
      %468 = vmatmul.bf16.gmra.mxu0 %v441
      %v469 = vpop.f32.mrf.mxu0
      %v470 = vadd.f32 0.0, %v469
      %v471 = vpop.f32.mrf.mxu0
      %v472 = vadd.f32 0.0, %v471
      %473 = vmatmul.bf16.gmra.mxu0 %v444
      %v474 = vpop.f32.mrf.mxu0
      %v475 = vadd.f32 0.0, %v474
      %v476 = vpop.f32.mrf.mxu0
      %v477 = vadd.f32 0.0, %v476
      %478 = vdwg.mxu0
      %v487 = vunpack.c.l.b16 %v394
      %v488 = vunpack.c.l.b16 %v395
      %v489 = vunpack.c.l.b16 %v396
      %v490 = vunpack.c.l.b16 %v397
      %v491 = vunpack.c.l.b16 %v398
      %v492 = vunpack.c.l.b16 %v399
      %v493 = vunpack.c.l.b16 %v400
      %v494 = vunpack.c.l.b16 %v401
      %v495 = vpack.c.b16 %v488, %v487
      %v496 = vpack.c.b16 %v490, %v489
      %v497 = vpack.c.b16 %v492, %v491
      %v498 = vpack.c.b16 %v494, %v493
      %v500 = vsel %vm433, %v495, 0
      %v503 = vsel %vm433, %v496, 0
      %v506 = vsel %vm433, %v497, 0
      %v509 = vsel %vm433, %v498, 0
      %v512 = vsel %vm446, %v402, 0
      %514 = vmatpush.bf16.msra.mxu0 0
      %515 = vmatpush.bf16.msra.mxu0 0
      %516 = vmatpush.bf16.msra.mxu0 0
      %517 = vmatpush.bf16.msra.mxu0 0
      %518 = vmatpush.bf16.msra.mxu0 0
      %519 = vmatpush.bf16.msra.mxu0 0
      %520 = vmatpush.bf16.msra.mxu0 0
      %521 = vmatpush.bf16.msra.mxu0 %v512
      %522 = vmatmul.bf16.gmra.mxu0 %v500
      %v523 = vpop.f32.mrf.mxu0
      %v524 = vadd.f32 %v460, %v523
      %v525 = vpop.f32.mrf.mxu0
      %v526 = vadd.f32 %v462, %v525
      %527 = vmatmul.bf16.gmra.mxu0 %v503
      %v528 = vpop.f32.mrf.mxu0
      %v529 = vadd.f32 %v465, %v528
      %v530 = vpop.f32.mrf.mxu0
      %v531 = vadd.f32 %v467, %v530
      %532 = vmatmul.bf16.gmra.mxu0 %v506
      %v533 = vpop.f32.mrf.mxu0
      %v534 = vadd.f32 %v470, %v533
      %v535 = vpop.f32.mrf.mxu0
      %v536 = vadd.f32 %v472, %v535
      %537 = vmatmul.bf16.gmra.mxu0 %v509
      %v538 = vpop.f32.mrf.mxu0
      %v539 = vadd.f32 %v475, %v538
      %v540 = vpop.f32.mrf.mxu0
      %v541 = vadd.f32 %v477, %v540
      %542 = vdwg.mxu0
      %v543 = vld [vmem:[%s372] sm:$0xf]
      %v544 = vld [vmem:[%s372 + $0x4] sm:$0x1]
      %v545 = vld [vmem:[%s372 + $0x8] sm:$0xf]
      %v546 = vld [vmem:[%s372 + $0xc] sm:$0x1]
      %v547 = vld [vmem:[%s372 + $0x10] sm:$0xf]
      %v548 = vld [vmem:[%s372 + $0x14] sm:$0x1]
      %v549 = vld [vmem:[%s372 + $0x18] sm:$0xf]
      %v550 = vld [vmem:[%s372 + $0x1c] sm:$0x1]
      %v551 = vld [vmem:[%s372 + $0x20] sm:$0xf]
      %v552 = vld [vmem:[%s372 + $0x24] sm:$0x1]
      %v553 = vld [vmem:[%s372 + $0x28] sm:$0xf]
      %v554 = vld [vmem:[%s372 + $0x2c] sm:$0x1]
      %v555 = vld [vmem:[%s372 + $0x30] sm:$0xf]
      %v556 = vld [vmem:[%s372 + $0x34] sm:$0x1]
      %v557 = vld [vmem:[%s372 + $0x38] sm:$0xf]
      %v558 = vld [vmem:[%s372 + $0x3c] sm:$0x1]
      %vm559 = vsmask.f32 3328
      %vm560 = vsmask.f32 7440
      %vm561 = vmor %vm559, %vm560
      %v563 = vshrl.u32 %v543, 16
      %v565 = vrot.slane %v563, 4
      %v566 = vshll.u32 %v543, 16
      %v568 = vrot.slane %v566, 5
      %v569 = vor.u32 %v565, %v568
      %v570 = vrot.slane %v569, 4
      %v572 = vshll.u32 %v544, 16
      %v574 = vrot.slane %v572, 5
      %v575 = vsel %vm561, %v570, %v574
      %v577 = vshrl.u32 %v545, 16
      %v579 = vrot.slane %v577, 4
      %v580 = vshll.u32 %v545, 16
      %v582 = vrot.slane %v580, 5
      %v583 = vor.u32 %v579, %v582
      %v584 = vrot.slane %v583, 4
      %v586 = vshll.u32 %v546, 16
      %v588 = vrot.slane %v586, 5
      %v589 = vsel %vm561, %v584, %v588
      %v591 = vshrl.u32 %v547, 16
      %v593 = vrot.slane %v591, 4
      %v594 = vshll.u32 %v547, 16
      %v596 = vrot.slane %v594, 5
      %v597 = vor.u32 %v593, %v596
      %v598 = vrot.slane %v597, 4
      %v600 = vshll.u32 %v548, 16
      %v602 = vrot.slane %v600, 5
      %v603 = vsel %vm561, %v598, %v602
      %v605 = vshrl.u32 %v549, 16
      %v607 = vrot.slane %v605, 4
      %v608 = vshll.u32 %v549, 16
      %v610 = vrot.slane %v608, 5
      %v611 = vor.u32 %v607, %v610
      %v612 = vrot.slane %v611, 4
      %v614 = vshll.u32 %v550, 16
      %v616 = vrot.slane %v614, 5
      %v617 = vsel %vm561, %v612, %v616
      %v619 = vshrl.u32 %v551, 16
      %v621 = vrot.slane %v619, 4
      %v622 = vshll.u32 %v551, 16
      %v624 = vrot.slane %v622, 5
      %v625 = vor.u32 %v621, %v624
      %v626 = vrot.slane %v625, 4
      %v628 = vshll.u32 %v552, 16
      %v630 = vrot.slane %v628, 5
      %v631 = vsel %vm561, %v626, %v630
      %v633 = vshrl.u32 %v553, 16
      %v635 = vrot.slane %v633, 4
      %v636 = vshll.u32 %v553, 16
      %v638 = vrot.slane %v636, 5
      %v639 = vor.u32 %v635, %v638
      %v640 = vrot.slane %v639, 4
      %v642 = vshll.u32 %v554, 16
      %v644 = vrot.slane %v642, 5
      %v645 = vsel %vm561, %v640, %v644
      %v647 = vshrl.u32 %v555, 16
      %v649 = vrot.slane %v647, 4
      %v650 = vshll.u32 %v555, 16
      %v652 = vrot.slane %v650, 5
      %v653 = vor.u32 %v649, %v652
      %v654 = vrot.slane %v653, 4
      %v656 = vshll.u32 %v556, 16
      %v658 = vrot.slane %v656, 5
      %v659 = vsel %vm561, %v654, %v658
      %v661 = vshrl.u32 %v557, 16
      %v663 = vrot.slane %v661, 4
      %v664 = vshll.u32 %v557, 16
      %v666 = vrot.slane %v664, 5
      %v667 = vor.u32 %v663, %v666
      %v668 = vrot.slane %v667, 4
      %v670 = vshll.u32 %v558, 16
      %v672 = vrot.slane %v670, 5
      %v673 = vsel %vm561, %v668, %v672
      %s674 = scalar_lea.vmem %s4, 4
      %v675 = vld [vmem:[%s674] sm:$0x3]
      %v676 = vunpack.c.l.b16 %v575
      %v677 = vunpack.c.l.b16 %v589
      %v678 = vunpack.c.l.b16 %v603
      %v679 = vunpack.c.l.b16 %v617
      %v680 = vunpack.c.l.b16 %v631
      %v681 = vunpack.c.l.b16 %v645
      %v682 = vunpack.c.l.b16 %v659
      %v683 = vunpack.c.l.b16 %v673
      %v684 = vpack.c.b16 %v677, %v676
      %v685 = vpack.c.b16 %v679, %v678
      %v686 = vpack.c.b16 %v681, %v680
      %v687 = vpack.c.b16 %v683, %v682
      %v689 = vsel %vm433, %v684, 0
      %v692 = vsel %vm433, %v685, 0
      %v695 = vsel %vm433, %v686, 0
      %v698 = vsel %vm433, %v687, 0
      %v701 = vsel %vm446, %v675, 0
      %703 = vmatpush.bf16.msra.mxu0 0
      %704 = vmatpush.bf16.msra.mxu0 0
      %705 = vmatpush.bf16.msra.mxu0 0
      %706 = vmatpush.bf16.msra.mxu0 0
      %707 = vmatpush.bf16.msra.mxu0 0
      %708 = vmatpush.bf16.msra.mxu0 0
      %709 = vmatpush.bf16.msra.mxu0 0
      %710 = vmatpush.bf16.msra.mxu0 %v701
      %711 = vmatmul.bf16.gmra.mxu0 %v689
      %v712 = vpop.f32.mrf.mxu0
      %v713 = vadd.f32 0.0, %v712
      %v714 = vpop.f32.mrf.mxu0
      %v715 = vadd.f32 0.0, %v714
      %716 = vmatmul.bf16.gmra.mxu0 %v692
      %v717 = vpop.f32.mrf.mxu0
      %v718 = vadd.f32 0.0, %v717
      %v719 = vpop.f32.mrf.mxu0
      %v720 = vadd.f32 0.0, %v719
      %721 = vmatmul.bf16.gmra.mxu0 %v695
      %v722 = vpop.f32.mrf.mxu0
      %v723 = vadd.f32 0.0, %v722
      %v724 = vpop.f32.mrf.mxu0
      %v725 = vadd.f32 0.0, %v724
      %726 = vmatmul.bf16.gmra.mxu0 %v698
      %v727 = vpop.f32.mrf.mxu0
      %v728 = vadd.f32 0.0, %v727
      %v729 = vpop.f32.mrf.mxu0
      %v730 = vadd.f32 0.0, %v729
      %731 = vdwg.mxu0
      %v732 = vadd.f32 %v524, %v713
      %v733 = vadd.f32 %v526, %v715
      %v734 = vadd.f32 %v529, %v718
      %v735 = vadd.f32 %v531, %v720
      %v736 = vadd.f32 %v534, %v723
      %v737 = vadd.f32 %v536, %v725
      %v738 = vadd.f32 %v539, %v728
      %v739 = vadd.f32 %v541, %v730
      %v740 = vld [vmem:[%s382] sm:$0xf]
      %v741 = vld [vmem:[%s382 + $0x8] sm:$0xf]
      %v742 = vld [vmem:[%s382 + $0x10] sm:$0xf]
      %v743 = vld [vmem:[%s382 + $0x18] sm:$0xf]
      %v744 = vld [vmem:[%s382 + $0x20] sm:$0xf]
      %v745 = vld [vmem:[%s382 + $0x28] sm:$0xf]
      %v746 = vld [vmem:[%s382 + $0x30] sm:$0xf]
      %v747 = vld [vmem:[%s382 + $0x38] sm:$0xf]
      %s748 = scalar_lea.vmem %s4, 6
      %v749 = vld [vmem:[%s748] sm:$0x3]
      %v758 = vunpack.c.l.b16 %v740
      %v759 = vunpack.c.l.b16 %v741
      %v760 = vunpack.c.l.b16 %v742
      %v761 = vunpack.c.l.b16 %v743
      %v762 = vunpack.c.l.b16 %v744
      %v763 = vunpack.c.l.b16 %v745
      %v764 = vunpack.c.l.b16 %v746
      %v765 = vunpack.c.l.b16 %v747
      %v766 = vpack.c.b16 %v759, %v758
      %v767 = vpack.c.b16 %v761, %v760
      %v768 = vpack.c.b16 %v763, %v762
      %v769 = vpack.c.b16 %v765, %v764
      %v771 = vsel %vm433, %v766, 0
      %v774 = vsel %vm433, %v767, 0
      %v777 = vsel %vm433, %v768, 0
      %v780 = vsel %vm433, %v769, 0
      %v783 = vsel %vm446, %v749, 0
      %785 = vmatpush.bf16.msra.mxu0 0
      %786 = vmatpush.bf16.msra.mxu0 0
      %787 = vmatpush.bf16.msra.mxu0 0
      %788 = vmatpush.bf16.msra.mxu0 0
      %789 = vmatpush.bf16.msra.mxu0 0
      %790 = vmatpush.bf16.msra.mxu0 0
      %791 = vmatpush.bf16.msra.mxu0 0
      %792 = vmatpush.bf16.msra.mxu0 %v783
      %793 = vmatmul.bf16.gmra.mxu0 %v771
      %v794 = vpop.f32.mrf.mxu0
      %v795 = vadd.f32 0.0, %v794
      %v796 = vpop.f32.mrf.mxu0
      %v797 = vadd.f32 0.0, %v796
      %798 = vmatmul.bf16.gmra.mxu0 %v774
      %v799 = vpop.f32.mrf.mxu0
      %v800 = vadd.f32 0.0, %v799
      %v801 = vpop.f32.mrf.mxu0
      %v802 = vadd.f32 0.0, %v801
      %803 = vmatmul.bf16.gmra.mxu0 %v777
      %v804 = vpop.f32.mrf.mxu0
      %v805 = vadd.f32 0.0, %v804
      %v806 = vpop.f32.mrf.mxu0
      %v807 = vadd.f32 0.0, %v806
      %808 = vmatmul.bf16.gmra.mxu0 %v780
      %v809 = vpop.f32.mrf.mxu0
      %v810 = vadd.f32 0.0, %v809
      %v811 = vpop.f32.mrf.mxu0
      %v812 = vadd.f32 0.0, %v811
      %813 = vdwg.mxu0
      %v814 = vadd.f32 %v732, %v795
      %v815 = vadd.f32 %v733, %v797
      %v816 = vadd.f32 %v734, %v800
      %v817 = vadd.f32 %v735, %v802
      %v818 = vadd.f32 %v736, %v805
      %v819 = vadd.f32 %v737, %v807
      %v820 = vadd.f32 %v738, %v810
      %v821 = vadd.f32 %v739, %v812
      %v822 = vld [vmem:[%s387] sm:$0xf]
      %v823 = vld [vmem:[%s387 + $0x8] sm:$0xf]
      %v824 = vld [vmem:[%s387 + $0x10] sm:$0xf]
      %v825 = vld [vmem:[%s387 + $0x18] sm:$0xf]
      %v826 = vld [vmem:[%s387 + $0x20] sm:$0xf]
      %v827 = vld [vmem:[%s387 + $0x28] sm:$0xf]
      %v828 = vld [vmem:[%s387 + $0x30] sm:$0xf]
      %v829 = vld [vmem:[%s387 + $0x38] sm:$0xf]
      %s830 = scalar_lea.vmem %s4, 8
      %v831 = vld [vmem:[%s830] sm:$0x3]
      %v840 = vunpack.c.l.b16 %v822
      %v841 = vunpack.c.l.b16 %v823
      %v842 = vunpack.c.l.b16 %v824
      %v843 = vunpack.c.l.b16 %v825
      %v844 = vunpack.c.l.b16 %v826
      %v845 = vunpack.c.l.b16 %v827
      %v846 = vunpack.c.l.b16 %v828
      %v847 = vunpack.c.l.b16 %v829
      %v848 = vpack.c.b16 %v841, %v840
      %v849 = vpack.c.b16 %v843, %v842
      %v850 = vpack.c.b16 %v845, %v844
      %v851 = vpack.c.b16 %v847, %v846
      %v853 = vsel %vm433, %v848, 0
      %v856 = vsel %vm433, %v849, 0
      %v859 = vsel %vm433, %v850, 0
      %v862 = vsel %vm433, %v851, 0
      %v865 = vsel %vm446, %v831, 0
      %867 = vmatpush.bf16.msra.mxu0 0
      %868 = vmatpush.bf16.msra.mxu0 0
      %869 = vmatpush.bf16.msra.mxu0 0
      %870 = vmatpush.bf16.msra.mxu0 0
      %871 = vmatpush.bf16.msra.mxu0 0
      %872 = vmatpush.bf16.msra.mxu0 0
      %873 = vmatpush.bf16.msra.mxu0 0
      %874 = vmatpush.bf16.msra.mxu0 %v865
      %875 = vmatmul.bf16.gmra.mxu0 %v853
      %v876 = vpop.f32.mrf.mxu0
      %v877 = vadd.f32 0.0, %v876
      %v878 = vpop.f32.mrf.mxu0
      %v879 = vadd.f32 0.0, %v878
      %880 = vmatmul.bf16.gmra.mxu0 %v856
      %v881 = vpop.f32.mrf.mxu0
      %v882 = vadd.f32 0.0, %v881
      %v883 = vpop.f32.mrf.mxu0
      %v884 = vadd.f32 0.0, %v883
      %885 = vmatmul.bf16.gmra.mxu0 %v859
      %v886 = vpop.f32.mrf.mxu0
      %v887 = vadd.f32 0.0, %v886
      %v888 = vpop.f32.mrf.mxu0
      %v889 = vadd.f32 0.0, %v888
      %890 = vmatmul.bf16.gmra.mxu0 %v862
      %v891 = vpop.f32.mrf.mxu0
      %v892 = vadd.f32 0.0, %v891
      %v893 = vpop.f32.mrf.mxu0
      %v894 = vadd.f32 0.0, %v893
      %895 = vdwg.mxu0
      %v896 = vadd.f32 %v814, %v877
      %v897 = vadd.f32 %v815, %v879
      %v898 = vadd.f32 %v816, %v882
      %v899 = vadd.f32 %v817, %v884
      %v900 = vadd.f32 %v818, %v887
      %v901 = vadd.f32 %v819, %v889
      %v902 = vadd.f32 %v820, %v892
      %v903 = vadd.f32 %v821, %v894
      %v904 = vld [vmem:[%s382] sm:$0xf]
      %v905 = vld [vmem:[%s382 + $0x4] sm:$0x1]
      %v906 = vld [vmem:[%s382 + $0x8] sm:$0xf]
      %v907 = vld [vmem:[%s382 + $0xc] sm:$0x1]
      %v908 = vld [vmem:[%s382 + $0x10] sm:$0xf]
      %v909 = vld [vmem:[%s382 + $0x14] sm:$0x1]
      %v910 = vld [vmem:[%s382 + $0x18] sm:$0xf]
      %v911 = vld [vmem:[%s382 + $0x1c] sm:$0x1]
      %v912 = vld [vmem:[%s382 + $0x20] sm:$0xf]
      %v913 = vld [vmem:[%s382 + $0x24] sm:$0x1]
      %v914 = vld [vmem:[%s382 + $0x28] sm:$0xf]
      %v915 = vld [vmem:[%s382 + $0x2c] sm:$0x1]
      %v916 = vld [vmem:[%s382 + $0x30] sm:$0xf]
      %v917 = vld [vmem:[%s382 + $0x34] sm:$0x1]
      %v918 = vld [vmem:[%s382 + $0x38] sm:$0xf]
      %v919 = vld [vmem:[%s382 + $0x3c] sm:$0x1]
      %v921 = vshrl.u32 %v904, 16
      %v923 = vrot.slane %v921, 4
      %v924 = vshll.u32 %v904, 16
      %v926 = vrot.slane %v924, 5
      %v927 = vor.u32 %v923, %v926
      %v928 = vrot.slane %v927, 4
      %v930 = vshll.u32 %v905, 16
      %v932 = vrot.slane %v930, 5
      %v933 = vsel %vm561, %v928, %v932
      %v935 = vshrl.u32 %v906, 16
      %v937 = vrot.slane %v935, 4
      %v938 = vshll.u32 %v906, 16
      %v940 = vrot.slane %v938, 5
      %v941 = vor.u32 %v937, %v940
      %v942 = vrot.slane %v941, 4
      %v944 = vshll.u32 %v907, 16
      %v946 = vrot.slane %v944, 5
      %v947 = vsel %vm561, %v942, %v946
      %v949 = vshrl.u32 %v908, 16
      %v951 = vrot.slane %v949, 4
      %v952 = vshll.u32 %v908, 16
      %v954 = vrot.slane %v952, 5
      %v955 = vor.u32 %v951, %v954
      %v956 = vrot.slane %v955, 4
      %v958 = vshll.u32 %v909, 16
      %v960 = vrot.slane %v958, 5
      %v961 = vsel %vm561, %v956, %v960
      %v963 = vshrl.u32 %v910, 16
      %v965 = vrot.slane %v963, 4
      %v966 = vshll.u32 %v910, 16
      %v968 = vrot.slane %v966, 5
      %v969 = vor.u32 %v965, %v968
      %v970 = vrot.slane %v969, 4
      %v972 = vshll.u32 %v911, 16
      %v974 = vrot.slane %v972, 5
      %v975 = vsel %vm561, %v970, %v974
      %v977 = vshrl.u32 %v912, 16
      %v979 = vrot.slane %v977, 4
      %v980 = vshll.u32 %v912, 16
      %v982 = vrot.slane %v980, 5
      %v983 = vor.u32 %v979, %v982
      %v984 = vrot.slane %v983, 4
      %v986 = vshll.u32 %v913, 16
      %v988 = vrot.slane %v986, 5
      %v989 = vsel %vm561, %v984, %v988
      %v991 = vshrl.u32 %v914, 16
      %v993 = vrot.slane %v991, 4
      %v994 = vshll.u32 %v914, 16
      %v996 = vrot.slane %v994, 5
      %v997 = vor.u32 %v993, %v996
      %v998 = vrot.slane %v997, 4
      %v1000 = vshll.u32 %v915, 16
      %v1002 = vrot.slane %v1000, 5
      %v1003 = vsel %vm561, %v998, %v1002
      %v1005 = vshrl.u32 %v916, 16
      %v1007 = vrot.slane %v1005, 4
      %v1008 = vshll.u32 %v916, 16
      %v1010 = vrot.slane %v1008, 5
      %v1011 = vor.u32 %v1007, %v1010
      %v1012 = vrot.slane %v1011, 4
      %v1014 = vshll.u32 %v917, 16
      %v1016 = vrot.slane %v1014, 5
      %v1017 = vsel %vm561, %v1012, %v1016
      %v1019 = vshrl.u32 %v918, 16
      %v1021 = vrot.slane %v1019, 4
      %v1022 = vshll.u32 %v918, 16
      %v1024 = vrot.slane %v1022, 5
      %v1025 = vor.u32 %v1021, %v1024
      %v1026 = vrot.slane %v1025, 4
      %v1028 = vshll.u32 %v919, 16
      %v1030 = vrot.slane %v1028, 5
      %v1031 = vsel %vm561, %v1026, %v1030
      %s1032 = scalar_lea.vmem %s4, 10
      %v1033 = vld [vmem:[%s1032] sm:$0x3]
      %v1034 = vunpack.c.l.b16 %v933
      %v1035 = vunpack.c.l.b16 %v947
      %v1036 = vunpack.c.l.b16 %v961
      %v1037 = vunpack.c.l.b16 %v975
      %v1038 = vunpack.c.l.b16 %v989
      %v1039 = vunpack.c.l.b16 %v1003
      %v1040 = vunpack.c.l.b16 %v1017
      %v1041 = vunpack.c.l.b16 %v1031
      %v1042 = vpack.c.b16 %v1035, %v1034
      %v1043 = vpack.c.b16 %v1037, %v1036
      %v1044 = vpack.c.b16 %v1039, %v1038
      %v1045 = vpack.c.b16 %v1041, %v1040
      %v1047 = vsel %vm433, %v1042, 0
      %v1050 = vsel %vm433, %v1043, 0
      %v1053 = vsel %vm433, %v1044, 0
      %v1056 = vsel %vm433, %v1045, 0
      %v1059 = vsel %vm446, %v1033, 0
      %1061 = vmatpush.bf16.msra.mxu0 0
      %1062 = vmatpush.bf16.msra.mxu0 0
      %1063 = vmatpush.bf16.msra.mxu0 0
      %1064 = vmatpush.bf16.msra.mxu0 0
      %1065 = vmatpush.bf16.msra.mxu0 0
      %1066 = vmatpush.bf16.msra.mxu0 0
      %1067 = vmatpush.bf16.msra.mxu0 0
      %1068 = vmatpush.bf16.msra.mxu0 %v1059
      %1069 = vmatmul.bf16.gmra.mxu0 %v1047
      %v1070 = vpop.f32.mrf.mxu0
      %v1071 = vadd.f32 0.0, %v1070
      %v1072 = vpop.f32.mrf.mxu0
      %v1073 = vadd.f32 0.0, %v1072
      %1074 = vmatmul.bf16.gmra.mxu0 %v1050
      %v1075 = vpop.f32.mrf.mxu0
      %v1076 = vadd.f32 0.0, %v1075
      %v1077 = vpop.f32.mrf.mxu0
      %v1078 = vadd.f32 0.0, %v1077
      %1079 = vmatmul.bf16.gmra.mxu0 %v1053
      %v1080 = vpop.f32.mrf.mxu0
      %v1081 = vadd.f32 0.0, %v1080
      %v1082 = vpop.f32.mrf.mxu0
      %v1083 = vadd.f32 0.0, %v1082
      %1084 = vmatmul.bf16.gmra.mxu0 %v1056
      %v1085 = vpop.f32.mrf.mxu0
      %v1086 = vadd.f32 0.0, %v1085
      %v1087 = vpop.f32.mrf.mxu0
      %v1088 = vadd.f32 0.0, %v1087
      %1089 = vdwg.mxu0
      %v1090 = vadd.f32 %v896, %v1071
      %v1091 = vadd.f32 %v897, %v1073
      %v1092 = vadd.f32 %v898, %v1076
      %v1093 = vadd.f32 %v899, %v1078
      %v1094 = vadd.f32 %v900, %v1081
      %v1095 = vadd.f32 %v901, %v1083
      %v1096 = vadd.f32 %v902, %v1086
      %v1097 = vadd.f32 %v903, %v1088
      %s1098 = scalar_lea.vmem %s372, 8
      %v1099 = vld [vmem:[%s1098] sm:$0xf]
      %v1100 = vld [vmem:[%s1098 + $0x8] sm:$0xf]
      %v1101 = vld [vmem:[%s1098 + $0x10] sm:$0xf]
      %v1102 = vld [vmem:[%s1098 + $0x18] sm:$0xf]
      %v1103 = vld [vmem:[%s1098 + $0x20] sm:$0xf]
      %v1104 = vld [vmem:[%s1098 + $0x28] sm:$0xf]
      %v1105 = vld [vmem:[%s1098 + $0x30] sm:$0xf]
      %v1106 = vld [vmem:[%s1098 + $0x38] sm:$0xf]
      %s1107 = scalar_lea.vmem %s4, 12
      %v1108 = vld [vmem:[%s1107] sm:$0x3]
      %v1117 = vunpack.c.l.b16 %v1099
      %v1118 = vunpack.c.l.b16 %v1100
      %v1119 = vunpack.c.l.b16 %v1101
      %v1120 = vunpack.c.l.b16 %v1102
      %v1121 = vunpack.c.l.b16 %v1103
      %v1122 = vunpack.c.l.b16 %v1104
      %v1123 = vunpack.c.l.b16 %v1105
      %v1124 = vunpack.c.l.b16 %v1106
      %v1125 = vpack.c.b16 %v1118, %v1117
      %v1126 = vpack.c.b16 %v1120, %v1119
      %v1127 = vpack.c.b16 %v1122, %v1121
      %v1128 = vpack.c.b16 %v1124, %v1123
      %v1130 = vsel %vm433, %v1125, 0
      %v1133 = vsel %vm433, %v1126, 0
      %v1136 = vsel %vm433, %v1127, 0
      %v1139 = vsel %vm433, %v1128, 0
      %v1142 = vsel %vm446, %v1108, 0
      %1144 = vmatpush.bf16.msra.mxu0 0
      %1145 = vmatpush.bf16.msra.mxu0 0
      %1146 = vmatpush.bf16.msra.mxu0 0
      %1147 = vmatpush.bf16.msra.mxu0 0
      %1148 = vmatpush.bf16.msra.mxu0 0
      %1149 = vmatpush.bf16.msra.mxu0 0
      %1150 = vmatpush.bf16.msra.mxu0 0
      %1151 = vmatpush.bf16.msra.mxu0 %v1142
      %1152 = vmatmul.bf16.gmra.mxu0 %v1130
      %v1153 = vpop.f32.mrf.mxu0
      %v1154 = vadd.f32 0.0, %v1153
      %v1155 = vpop.f32.mrf.mxu0
      %v1156 = vadd.f32 0.0, %v1155
      %1157 = vmatmul.bf16.gmra.mxu0 %v1133
      %v1158 = vpop.f32.mrf.mxu0
      %v1159 = vadd.f32 0.0, %v1158
      %v1160 = vpop.f32.mrf.mxu0
      %v1161 = vadd.f32 0.0, %v1160
      %1162 = vmatmul.bf16.gmra.mxu0 %v1136
      %v1163 = vpop.f32.mrf.mxu0
      %v1164 = vadd.f32 0.0, %v1163
      %v1165 = vpop.f32.mrf.mxu0
      %v1166 = vadd.f32 0.0, %v1165
      %1167 = vmatmul.bf16.gmra.mxu0 %v1139
      %v1168 = vpop.f32.mrf.mxu0
      %v1169 = vadd.f32 0.0, %v1168
      %v1170 = vpop.f32.mrf.mxu0
      %v1171 = vadd.f32 0.0, %v1170
      %1172 = vdwg.mxu0
      %v1173 = vadd.f32 %v1090, %v1154
      %v1174 = vadd.f32 %v1091, %v1156
      %v1175 = vadd.f32 %v1092, %v1159
      %v1176 = vadd.f32 %v1093, %v1161
      %v1177 = vadd.f32 %v1094, %v1164
      %v1178 = vadd.f32 %v1095, %v1166
      %v1179 = vadd.f32 %v1096, %v1169
      %v1180 = vadd.f32 %v1097, %v1171
      %s1181 = scalar_lea.vmem %s377, 8
      %v1182 = vld [vmem:[%s1181] sm:$0xf]
      %v1183 = vld [vmem:[%s1181 + $0x8] sm:$0xf]
      %v1184 = vld [vmem:[%s1181 + $0x10] sm:$0xf]
      %v1185 = vld [vmem:[%s1181 + $0x18] sm:$0xf]
      %v1186 = vld [vmem:[%s1181 + $0x20] sm:$0xf]
      %v1187 = vld [vmem:[%s1181 + $0x28] sm:$0xf]
      %v1188 = vld [vmem:[%s1181 + $0x30] sm:$0xf]
      %v1189 = vld [vmem:[%s1181 + $0x38] sm:$0xf]
      %s1190 = scalar_lea.vmem %s4, 14
      %v1191 = vld [vmem:[%s1190] sm:$0x3]
      %v1200 = vunpack.c.l.b16 %v1182
      %v1201 = vunpack.c.l.b16 %v1183
      %v1202 = vunpack.c.l.b16 %v1184
      %v1203 = vunpack.c.l.b16 %v1185
      %v1204 = vunpack.c.l.b16 %v1186
      %v1205 = vunpack.c.l.b16 %v1187
      %v1206 = vunpack.c.l.b16 %v1188
      %v1207 = vunpack.c.l.b16 %v1189
      %v1208 = vpack.c.b16 %v1201, %v1200
      %v1209 = vpack.c.b16 %v1203, %v1202
      %v1210 = vpack.c.b16 %v1205, %v1204
      %v1211 = vpack.c.b16 %v1207, %v1206
      %v1213 = vsel %vm433, %v1208, 0
      %v1216 = vsel %vm433, %v1209, 0
      %v1219 = vsel %vm433, %v1210, 0
      %v1222 = vsel %vm433, %v1211, 0
      %v1225 = vsel %vm446, %v1191, 0
      %1227 = vmatpush.bf16.msra.mxu0 0
      %1228 = vmatpush.bf16.msra.mxu0 0
      %1229 = vmatpush.bf16.msra.mxu0 0
      %1230 = vmatpush.bf16.msra.mxu0 0
      %1231 = vmatpush.bf16.msra.mxu0 0
      %1232 = vmatpush.bf16.msra.mxu0 0
      %1233 = vmatpush.bf16.msra.mxu0 0
      %1234 = vmatpush.bf16.msra.mxu0 %v1225
      %1235 = vmatmul.bf16.gmra.mxu0 %v1213
      %v1236 = vpop.f32.mrf.mxu0
      %v1237 = vadd.f32 0.0, %v1236
      %v1238 = vpop.f32.mrf.mxu0
      %v1239 = vadd.f32 0.0, %v1238
      %1240 = vmatmul.bf16.gmra.mxu0 %v1216
      %v1241 = vpop.f32.mrf.mxu0
      %v1242 = vadd.f32 0.0, %v1241
      %v1243 = vpop.f32.mrf.mxu0
      %v1244 = vadd.f32 0.0, %v1243
      %1245 = vmatmul.bf16.gmra.mxu0 %v1219
      %v1246 = vpop.f32.mrf.mxu0
      %v1247 = vadd.f32 0.0, %v1246
      %v1248 = vpop.f32.mrf.mxu0
      %v1249 = vadd.f32 0.0, %v1248
      %1250 = vmatmul.bf16.gmra.mxu0 %v1222
      %v1251 = vpop.f32.mrf.mxu0
      %v1252 = vadd.f32 0.0, %v1251
      %v1253 = vpop.f32.mrf.mxu0
      %v1254 = vadd.f32 0.0, %v1253
      %1255 = vdwg.mxu0
      %v1256 = vadd.f32 %v1173, %v1237
      %v1257 = vadd.f32 %v1174, %v1239
      %v1258 = vadd.f32 %v1175, %v1242
      %v1259 = vadd.f32 %v1176, %v1244
      %v1260 = vadd.f32 %v1177, %v1247
      %v1261 = vadd.f32 %v1178, %v1249
      %v1262 = vadd.f32 %v1179, %v1252
      %v1263 = vadd.f32 %v1180, %v1254
      %v1264 = vld [vmem:[%s1098] sm:$0xf]
      %v1265 = vld [vmem:[%s1098 + $0x4] sm:$0x1]
      %v1266 = vld [vmem:[%s1098 + $0x8] sm:$0xf]
      %v1267 = vld [vmem:[%s1098 + $0xc] sm:$0x1]
      %v1268 = vld [vmem:[%s1098 + $0x10] sm:$0xf]
      %v1269 = vld [vmem:[%s1098 + $0x14] sm:$0x1]
      %v1270 = vld [vmem:[%s1098 + $0x18] sm:$0xf]
      %v1271 = vld [vmem:[%s1098 + $0x1c] sm:$0x1]
      %v1272 = vld [vmem:[%s1098 + $0x20] sm:$0xf]
      %v1273 = vld [vmem:[%s1098 + $0x24] sm:$0x1]
      %v1274 = vld [vmem:[%s1098 + $0x28] sm:$0xf]
      %v1275 = vld [vmem:[%s1098 + $0x2c] sm:$0x1]
      %v1276 = vld [vmem:[%s1098 + $0x30] sm:$0xf]
      %v1277 = vld [vmem:[%s1098 + $0x34] sm:$0x1]
      %v1278 = vld [vmem:[%s1098 + $0x38] sm:$0xf]
      %v1279 = vld [vmem:[%s1098 + $0x3c] sm:$0x1]
      %v1281 = vshrl.u32 %v1264, 16
      %v1283 = vrot.slane %v1281, 4
      %v1284 = vshll.u32 %v1264, 16
      %v1286 = vrot.slane %v1284, 5
      %v1287 = vor.u32 %v1283, %v1286
      %v1288 = vrot.slane %v1287, 4
      %v1290 = vshll.u32 %v1265, 16
      %v1292 = vrot.slane %v1290, 5
      %v1293 = vsel %vm561, %v1288, %v1292
      %v1295 = vshrl.u32 %v1266, 16
      %v1297 = vrot.slane %v1295, 4
      %v1298 = vshll.u32 %v1266, 16
      %v1300 = vrot.slane %v1298, 5
      %v1301 = vor.u32 %v1297, %v1300
      %v1302 = vrot.slane %v1301, 4
      %v1304 = vshll.u32 %v1267, 16
      %v1306 = vrot.slane %v1304, 5
      %v1307 = vsel %vm561, %v1302, %v1306
      %v1309 = vshrl.u32 %v1268, 16
      %v1311 = vrot.slane %v1309, 4
      %v1312 = vshll.u32 %v1268, 16
      %v1314 = vrot.slane %v1312, 5
      %v1315 = vor.u32 %v1311, %v1314
      %v1316 = vrot.slane %v1315, 4
      %v1318 = vshll.u32 %v1269, 16
      %v1320 = vrot.slane %v1318, 5
      %v1321 = vsel %vm561, %v1316, %v1320
      %v1323 = vshrl.u32 %v1270, 16
      %v1325 = vrot.slane %v1323, 4
      %v1326 = vshll.u32 %v1270, 16
      %v1328 = vrot.slane %v1326, 5
      %v1329 = vor.u32 %v1325, %v1328
      %v1330 = vrot.slane %v1329, 4
      %v1332 = vshll.u32 %v1271, 16
      %v1334 = vrot.slane %v1332, 5
      %v1335 = vsel %vm561, %v1330, %v1334
      %v1337 = vshrl.u32 %v1272, 16
      %v1339 = vrot.slane %v1337, 4
      %v1340 = vshll.u32 %v1272, 16
      %v1342 = vrot.slane %v1340, 5
      %v1343 = vor.u32 %v1339, %v1342
      %v1344 = vrot.slane %v1343, 4
      %v1346 = vshll.u32 %v1273, 16
      %v1348 = vrot.slane %v1346, 5
      %v1349 = vsel %vm561, %v1344, %v1348
      %v1351 = vshrl.u32 %v1274, 16
      %v1353 = vrot.slane %v1351, 4
      %v1354 = vshll.u32 %v1274, 16
      %v1356 = vrot.slane %v1354, 5
      %v1357 = vor.u32 %v1353, %v1356
      %v1358 = vrot.slane %v1357, 4
      %v1360 = vshll.u32 %v1275, 16
      %v1362 = vrot.slane %v1360, 5
      %v1363 = vsel %vm561, %v1358, %v1362
      %v1365 = vshrl.u32 %v1276, 16
      %v1367 = vrot.slane %v1365, 4
      %v1368 = vshll.u32 %v1276, 16
      %v1370 = vrot.slane %v1368, 5
      %v1371 = vor.u32 %v1367, %v1370
      %v1372 = vrot.slane %v1371, 4
      %v1374 = vshll.u32 %v1277, 16
      %v1376 = vrot.slane %v1374, 5
      %v1377 = vsel %vm561, %v1372, %v1376
      %v1379 = vshrl.u32 %v1278, 16
      %v1381 = vrot.slane %v1379, 4
      %v1382 = vshll.u32 %v1278, 16
      %v1384 = vrot.slane %v1382, 5
      %v1385 = vor.u32 %v1381, %v1384
      %v1386 = vrot.slane %v1385, 4
      %v1388 = vshll.u32 %v1279, 16
      %v1390 = vrot.slane %v1388, 5
      %v1391 = vsel %vm561, %v1386, %v1390
      %s1392 = scalar_lea.vmem %s4, 16
      %v1393 = vld [vmem:[%s1392] sm:$0x3]
      %v1394 = vunpack.c.l.b16 %v1293
      %v1395 = vunpack.c.l.b16 %v1307
      %v1396 = vunpack.c.l.b16 %v1321
      %v1397 = vunpack.c.l.b16 %v1335
      %v1398 = vunpack.c.l.b16 %v1349
      %v1399 = vunpack.c.l.b16 %v1363
      %v1400 = vunpack.c.l.b16 %v1377
      %v1401 = vunpack.c.l.b16 %v1391
      %v1402 = vpack.c.b16 %v1395, %v1394
      %v1403 = vpack.c.b16 %v1397, %v1396
      %v1404 = vpack.c.b16 %v1399, %v1398
      %v1405 = vpack.c.b16 %v1401, %v1400
      %v1407 = vsel %vm433, %v1402, 0
      %v1410 = vsel %vm433, %v1403, 0
      %v1413 = vsel %vm433, %v1404, 0
      %v1416 = vsel %vm433, %v1405, 0
      %v1419 = vsel %vm446, %v1393, 0
      %1421 = vmatpush.bf16.msra.mxu0 0
      %1422 = vmatpush.bf16.msra.mxu0 0
      %1423 = vmatpush.bf16.msra.mxu0 0
      %1424 = vmatpush.bf16.msra.mxu0 0
      %1425 = vmatpush.bf16.msra.mxu0 0
      %1426 = vmatpush.bf16.msra.mxu0 0
      %1427 = vmatpush.bf16.msra.mxu0 0
      %1428 = vmatpush.bf16.msra.mxu0 %v1419
      %1429 = vmatmul.bf16.gmra.mxu0 %v1407
      %v1430 = vpop.f32.mrf.mxu0
      %v1431 = vadd.f32 0.0, %v1430
      %v1432 = vpop.f32.mrf.mxu0
      %v1433 = vadd.f32 0.0, %v1432
      %1434 = vmatmul.bf16.gmra.mxu0 %v1410
      %v1435 = vpop.f32.mrf.mxu0
      %v1436 = vadd.f32 0.0, %v1435
      %v1437 = vpop.f32.mrf.mxu0
      %v1438 = vadd.f32 0.0, %v1437
      %1439 = vmatmul.bf16.gmra.mxu0 %v1413
      %v1440 = vpop.f32.mrf.mxu0
      %v1441 = vadd.f32 0.0, %v1440
      %v1442 = vpop.f32.mrf.mxu0
      %v1443 = vadd.f32 0.0, %v1442
      %1444 = vmatmul.bf16.gmra.mxu0 %v1416
      %v1445 = vpop.f32.mrf.mxu0
      %v1446 = vadd.f32 0.0, %v1445
      %v1447 = vpop.f32.mrf.mxu0
      %v1448 = vadd.f32 0.0, %v1447
      %1449 = vdwg.mxu0
      %v1450 = vadd.f32 %v1256, %v1431
      %v1451 = vadd.f32 %v1257, %v1433
      %v1452 = vadd.f32 %v1258, %v1436
      %v1453 = vadd.f32 %v1259, %v1438
      %v1454 = vadd.f32 %v1260, %v1441
      %v1455 = vadd.f32 %v1261, %v1443
      %v1456 = vadd.f32 %v1262, %v1446
      %v1457 = vadd.f32 %v1263, %v1448
      %v1458 = vld [vmem:[%s5] sm:$0x1]
      %v1460 = vperm.slane %v1458, 0
      %v1462 = vadd.f32 %v1450, %v1460
      %v1463 = vadd.f32 %v1451, %v1460
      %v1464 = vadd.f32 %v1452, %v1460
      %v1465 = vadd.f32 %v1453, %v1460
      %v1466 = vadd.f32 %v1454, %v1460
      %v1467 = vadd.f32 %v1455, %v1460
      %v1468 = vadd.f32 %v1456, %v1460
      %v1469 = vadd.f32 %v1457, %v1460
      %v1470 = vmax.f32 %v1462, 0.0
      %v1471 = vmax.f32 %v1463, 0.0
      %v1472 = vmax.f32 %v1464, 0.0
      %v1473 = vmax.f32 %v1465, 0.0
      %v1474 = vmax.f32 %v1466, 0.0
      %v1475 = vmax.f32 %v1467, 0.0
      %v1476 = vmax.f32 %v1468, 0.0
      %v1477 = vmax.f32 %v1469, 0.0
      %v1478 = vpack.c.bf16 %v1470, %v1470
      %v1479 = vpack.c.bf16 %v1471, %v1471
      %v1480 = vpack.c.bf16 %v1472, %v1472
      %v1481 = vpack.c.bf16 %v1473, %v1473
      %v1482 = vpack.c.bf16 %v1474, %v1474
      %v1483 = vpack.c.bf16 %v1475, %v1475
      %v1484 = vpack.c.bf16 %v1476, %v1476
      %v1485 = vpack.c.bf16 %v1477, %v1477
      %vm1486 = vcmask 60416
      %1487 = vst.msk [vmem:[#allocation2] sm:$0xf] %vm1486, 0
      %vm1488 = vcmask 57344
      %1489 = vst.msk [vmem:[#allocation2 + $0x4] sm:$0x1] %vm1488, 0
      %1490 = vst.msk [vmem:[#allocation2 + $0x8] sm:$0xf] %vm1486, 0
      %1491 = vst.msk [vmem:[#allocation2 + $0xc] sm:$0x1] %vm1488, 0
      %1492 = vst.msk [vmem:[#allocation2 + $0x10] sm:$0xf] %vm1486, 0
      %1493 = vst.msk [vmem:[#allocation2 + $0x14] sm:$0x1] %vm1488, 0
      %1494 = vst.msk [vmem:[#allocation2 + $0x18] sm:$0xf] %vm1486, 0
      %1495 = vst.msk [vmem:[#allocation2 + $0x1c] sm:$0x1] %vm1488, 0
      %1496 = vst.msk [vmem:[#allocation2 + $0x20] sm:$0xf] %vm1486, 0
      %1497 = vst.msk [vmem:[#allocation2 + $0x24] sm:$0x1] %vm1488, 0
      %1498 = vst.msk [vmem:[#allocation2 + $0x28] sm:$0xf] %vm1486, 0
      %1499 = vst.msk [vmem:[#allocation2 + $0x2c] sm:$0x1] %vm1488, 0
      %1500 = vst.msk [vmem:[#allocation2 + $0x30] sm:$0xf] %vm1486, 0
      %1501 = vst.msk [vmem:[#allocation2 + $0x34] sm:$0x1] %vm1488, 0
      %1502 = vst.msk [vmem:[#allocation2 + $0x38] sm:$0xf] %vm1486, 0
      %1503 = vst.msk [vmem:[#allocation2 + $0x3c] sm:$0x1] %vm1488, 0
      %1504 = vst.msk [vmem:[#allocation2 + $0x40] sm:$0xf] %vm1486, 0
      %1505 = vst.msk [vmem:[#allocation2 + $0x44] sm:$0x1] %vm1488, 0
      %1506 = vst.msk [vmem:[#allocation2 + $0x48] sm:$0xf] %vm1486, 0
      %1507 = vst.msk [vmem:[#allocation2 + $0x4c] sm:$0x1] %vm1488, 0
      %v1509 = vshrl.u32 %v1478, 16
      %v1511 = vrot.slane %v1509, 7
      %v1512 = vshll.u32 %v1478, 16
      %v1514 = vor.u32 %v1511, %v1512
      %v1515 = vrot.slane %v1511, 4
      %v1517 = vshrl.u32 %v1479, 16
      %v1519 = vrot.slane %v1517, 7
      %v1520 = vshll.u32 %v1479, 16
      %v1522 = vor.u32 %v1519, %v1520
      %v1523 = vrot.slane %v1519, 4
      %v1525 = vshrl.u32 %v1480, 16
      %v1527 = vrot.slane %v1525, 7
      %v1528 = vshll.u32 %v1480, 16
      %v1530 = vor.u32 %v1527, %v1528
      %v1531 = vrot.slane %v1527, 4
      %v1533 = vshrl.u32 %v1481, 16
      %v1535 = vrot.slane %v1533, 7
      %v1536 = vshll.u32 %v1481, 16
      %v1538 = vor.u32 %v1535, %v1536
      %v1539 = vrot.slane %v1535, 4
      %v1541 = vshrl.u32 %v1482, 16
      %v1543 = vrot.slane %v1541, 7
      %v1544 = vshll.u32 %v1482, 16
      %v1546 = vor.u32 %v1543, %v1544
      %v1547 = vrot.slane %v1543, 4
      %v1549 = vshrl.u32 %v1483, 16
      %v1551 = vrot.slane %v1549, 7
      %v1552 = vshll.u32 %v1483, 16
      %v1554 = vor.u32 %v1551, %v1552
      %v1555 = vrot.slane %v1551, 4
      %v1557 = vshrl.u32 %v1484, 16
      %v1559 = vrot.slane %v1557, 7
      %v1560 = vshll.u32 %v1484, 16
      %v1562 = vor.u32 %v1559, %v1560
      %v1563 = vrot.slane %v1559, 4
      %v1565 = vshrl.u32 %v1485, 16
      %v1567 = vrot.slane %v1565, 7
      %v1568 = vshll.u32 %v1485, 16
      %v1570 = vor.u32 %v1567, %v1568
      %v1571 = vrot.slane %v1567, 4
      %s1588 = scalar_lea.vmem [#allocation2], 8
      %vm1589 = vcmask 60416
      %vm1590 = vsmask.f32 7938
      %vm1591 = vmand %vm1589, %vm1590
      %v1592 = vld [vmem:[%s1588] sm:$0xf]
      %v1593 = vsel %vm1591, %v1514, %v1592
      %1594 = vst [vmem:[%s1588] sm:$0xf] %v1593
      %vm1595 = vcmask 57344
      %vm1596 = vsmask.f32 256
      %vm1597 = vmand %vm1595, %vm1596
      %v1598 = vld [vmem:[%s1588 + $0x4] sm:$0x1]
      %v1599 = vsel %vm1597, %v1515, %v1598
      %1600 = vst [vmem:[%s1588 + $0x4] sm:$0x1] %v1599
      %v1601 = vld [vmem:[%s1588 + $0x8] sm:$0xf]
      %v1602 = vsel %vm1591, %v1522, %v1601
      %1603 = vst [vmem:[%s1588 + $0x8] sm:$0xf] %v1602
      %v1604 = vld [vmem:[%s1588 + $0xc] sm:$0x1]
      %v1605 = vsel %vm1597, %v1523, %v1604
      %1606 = vst [vmem:[%s1588 + $0xc] sm:$0x1] %v1605
      %v1607 = vld [vmem:[%s1588 + $0x10] sm:$0xf]
      %v1608 = vsel %vm1591, %v1530, %v1607
      %1609 = vst [vmem:[%s1588 + $0x10] sm:$0xf] %v1608
      %v1610 = vld [vmem:[%s1588 + $0x14] sm:$0x1]
      %v1611 = vsel %vm1597, %v1531, %v1610
      %1612 = vst [vmem:[%s1588 + $0x14] sm:$0x1] %v1611
      %v1613 = vld [vmem:[%s1588 + $0x18] sm:$0xf]
      %v1614 = vsel %vm1591, %v1538, %v1613
      %1615 = vst [vmem:[%s1588 + $0x18] sm:$0xf] %v1614
      %v1616 = vld [vmem:[%s1588 + $0x1c] sm:$0x1]
      %v1617 = vsel %vm1597, %v1539, %v1616
      %1618 = vst [vmem:[%s1588 + $0x1c] sm:$0x1] %v1617
      %v1619 = vld [vmem:[%s1588 + $0x20] sm:$0xf]
      %v1620 = vsel %vm1591, %v1546, %v1619
      %1621 = vst [vmem:[%s1588 + $0x20] sm:$0xf] %v1620
      %v1622 = vld [vmem:[%s1588 + $0x24] sm:$0x1]
      %v1623 = vsel %vm1597, %v1547, %v1622
      %1624 = vst [vmem:[%s1588 + $0x24] sm:$0x1] %v1623
      %v1625 = vld [vmem:[%s1588 + $0x28] sm:$0xf]
      %v1626 = vsel %vm1591, %v1554, %v1625
      %1627 = vst [vmem:[%s1588 + $0x28] sm:$0xf] %v1626
      %v1628 = vld [vmem:[%s1588 + $0x2c] sm:$0x1]
      %v1629 = vsel %vm1597, %v1555, %v1628
      %1630 = vst [vmem:[%s1588 + $0x2c] sm:$0x1] %v1629
      %v1631 = vld [vmem:[%s1588 + $0x30] sm:$0xf]
      %v1632 = vsel %vm1591, %v1562, %v1631
      %1633 = vst [vmem:[%s1588 + $0x30] sm:$0xf] %v1632
      %v1634 = vld [vmem:[%s1588 + $0x34] sm:$0x1]
      %v1635 = vsel %vm1597, %v1563, %v1634
      %1636 = vst [vmem:[%s1588 + $0x34] sm:$0x1] %v1635
      %v1637 = vld [vmem:[%s1588 + $0x38] sm:$0xf]
      %v1638 = vsel %vm1591, %v1570, %v1637
      %1639 = vst [vmem:[%s1588 + $0x38] sm:$0xf] %v1638
      %v1640 = vld [vmem:[%s1588 + $0x3c] sm:$0x1]
      %v1641 = vsel %vm1597, %v1571, %v1640
      %1642 = vst [vmem:[%s1588 + $0x3c] sm:$0x1] %v1641
      %v1643 = vld [vmem:[#allocation2] sm:$0xf]
      %v1644 = vld [vmem:[#allocation2 + $0x8] sm:$0xf]
      %v1645 = vld [vmem:[#allocation2 + $0x10] sm:$0xf]
      %v1646 = vld [vmem:[#allocation2 + $0x18] sm:$0xf]
      %v1647 = vld [vmem:[#allocation2 + $0x20] sm:$0xf]
      %v1648 = vld [vmem:[#allocation2 + $0x28] sm:$0xf]
      %v1649 = vld [vmem:[#allocation2 + $0x30] sm:$0xf]
      %v1650 = vld [vmem:[#allocation2 + $0x38] sm:$0xf]
      %v1651 = vld [vmem:[%s6] sm:$0xf]
      %v1652 = vld [vmem:[#allocation2 + $0x4] sm:$0x1]
      %v1653 = vld [vmem:[#allocation2 + $0xc] sm:$0x1]
      %v1654 = vld [vmem:[#allocation2 + $0x14] sm:$0x1]
      %v1655 = vld [vmem:[#allocation2 + $0x1c] sm:$0x1]
      %v1656 = vld [vmem:[#allocation2 + $0x24] sm:$0x1]
      %v1657 = vld [vmem:[#allocation2 + $0x2c] sm:$0x1]
      %v1658 = vld [vmem:[#allocation2 + $0x34] sm:$0x1]
      %v1659 = vld [vmem:[#allocation2 + $0x3c] sm:$0x1]
      %v1661 = vshrl.u32 %v1643, 16
      %v1663 = vrot.slane %v1661, 4
      %v1664 = vshll.u32 %v1643, 16
      %v1666 = vrot.slane %v1664, 5
      %v1667 = vor.u32 %v1663, %v1666
      %v1668 = vrot.slane %v1667, 4
      %v1670 = vshll.u32 %v1652, 16
      %v1672 = vrot.slane %v1670, 5
      %v1673 = vsel %vm561, %v1668, %v1672
      %v1675 = vshrl.u32 %v1644, 16
      %v1677 = vrot.slane %v1675, 4
      %v1678 = vshll.u32 %v1644, 16
      %v1680 = vrot.slane %v1678, 5
      %v1681 = vor.u32 %v1677, %v1680
      %v1682 = vrot.slane %v1681, 4
      %v1684 = vshll.u32 %v1653, 16
      %v1686 = vrot.slane %v1684, 5
      %v1687 = vsel %vm561, %v1682, %v1686
      %v1689 = vshrl.u32 %v1645, 16
      %v1691 = vrot.slane %v1689, 4
      %v1692 = vshll.u32 %v1645, 16
      %v1694 = vrot.slane %v1692, 5
      %v1695 = vor.u32 %v1691, %v1694
      %v1696 = vrot.slane %v1695, 4
      %v1698 = vshll.u32 %v1654, 16
      %v1700 = vrot.slane %v1698, 5
      %v1701 = vsel %vm561, %v1696, %v1700
      %v1703 = vshrl.u32 %v1646, 16
      %v1705 = vrot.slane %v1703, 4
      %v1706 = vshll.u32 %v1646, 16
      %v1708 = vrot.slane %v1706, 5
      %v1709 = vor.u32 %v1705, %v1708
      %v1710 = vrot.slane %v1709, 4
      %v1712 = vshll.u32 %v1655, 16
      %v1714 = vrot.slane %v1712, 5
      %v1715 = vsel %vm561, %v1710, %v1714
      %v1717 = vshrl.u32 %v1647, 16
      %v1719 = vrot.slane %v1717, 4
      %v1720 = vshll.u32 %v1647, 16
      %v1722 = vrot.slane %v1720, 5
      %v1723 = vor.u32 %v1719, %v1722
      %v1724 = vrot.slane %v1723, 4
      %v1726 = vshll.u32 %v1656, 16
      %v1728 = vrot.slane %v1726, 5
      %v1729 = vsel %vm561, %v1724, %v1728
      %v1731 = vshrl.u32 %v1648, 16
      %v1733 = vrot.slane %v1731, 4
      %v1734 = vshll.u32 %v1648, 16
      %v1736 = vrot.slane %v1734, 5
      %v1737 = vor.u32 %v1733, %v1736
      %v1738 = vrot.slane %v1737, 4
      %v1740 = vshll.u32 %v1657, 16
      %v1742 = vrot.slane %v1740, 5
      %v1743 = vsel %vm561, %v1738, %v1742
      %v1745 = vshrl.u32 %v1649, 16
      %v1747 = vrot.slane %v1745, 4
      %v1748 = vshll.u32 %v1649, 16
      %v1750 = vrot.slane %v1748, 5
      %v1751 = vor.u32 %v1747, %v1750
      %v1752 = vrot.slane %v1751, 4
      %v1754 = vshll.u32 %v1658, 16
      %v1756 = vrot.slane %v1754, 5
      %v1757 = vsel %vm561, %v1752, %v1756
      %v1759 = vshrl.u32 %v1650, 16
      %v1761 = vrot.slane %v1759, 4
      %v1762 = vshll.u32 %v1650, 16
      %v1764 = vrot.slane %v1762, 5
      %v1765 = vor.u32 %v1761, %v1764
      %v1766 = vrot.slane %v1765, 4
      %v1768 = vshll.u32 %v1659, 16
      %v1770 = vrot.slane %v1768, 5
      %v1771 = vsel %vm561, %v1766, %v1770
      %s1772 = scalar_lea.vmem %s6, 4
      %v1773 = vld [vmem:[%s1772] sm:$0xf]
      %v1774 = vunpack.c.l.b16 %v1673
      %v1775 = vunpack.c.l.b16 %v1687
      %v1776 = vunpack.c.l.b16 %v1701
      %v1777 = vunpack.c.l.b16 %v1715
      %v1778 = vunpack.c.l.b16 %v1729
      %v1779 = vunpack.c.l.b16 %v1743
      %v1780 = vunpack.c.l.b16 %v1757
      %v1781 = vunpack.c.l.b16 %v1771
      %v1782 = vpack.c.b16 %v1775, %v1774
      %v1783 = vpack.c.b16 %v1777, %v1776
      %v1784 = vpack.c.b16 %v1779, %v1778
      %v1785 = vpack.c.b16 %v1781, %v1780
      %vm1786 = vcmask 64512
      %v1788 = vsel %vm1786, %v1782, 0
      %v1791 = vsel %vm1786, %v1783, 0
      %v1794 = vsel %vm1786, %v1784, 0
      %v1797 = vsel %vm1786, %v1785, 0
      %vm1799 = vcmask 1043456
      %v1801 = vsel %vm1799, %v1773, 0
      %1803 = vmatpush.bf16.msra.mxu0 0
      %1804 = vmatpush.bf16.msra.mxu0 0
      %1805 = vmatpush.bf16.msra.mxu0 0
      %1806 = vmatpush.bf16.msra.mxu0 0
      %1807 = vmatpush.bf16.msra.mxu0 0
      %1808 = vmatpush.bf16.msra.mxu0 0
      %1809 = vmatpush.bf16.msra.mxu0 0
      %1810 = vmatpush.bf16.msra.mxu0 %v1801
      %1811 = vmatmul.bf16.gmra.mxu0 %v1788
      %v1812 = vpop.f32.mrf.mxu0
      %v1813 = vadd.f32 0.0, %v1812
      %v1814 = vpop.f32.mrf.mxu0
      %v1815 = vadd.f32 0.0, %v1814
      %1816 = vmatmul.bf16.gmra.mxu0 %v1791
      %v1817 = vpop.f32.mrf.mxu0
      %v1818 = vadd.f32 0.0, %v1817
      %v1819 = vpop.f32.mrf.mxu0
      %v1820 = vadd.f32 0.0, %v1819
      %1821 = vmatmul.bf16.gmra.mxu0 %v1794
      %v1822 = vpop.f32.mrf.mxu0
      %v1823 = vadd.f32 0.0, %v1822
      %v1824 = vpop.f32.mrf.mxu0
      %v1825 = vadd.f32 0.0, %v1824
      %1826 = vmatmul.bf16.gmra.mxu0 %v1797
      %v1827 = vpop.f32.mrf.mxu0
      %v1828 = vadd.f32 0.0, %v1827
      %v1829 = vpop.f32.mrf.mxu0
      %v1830 = vadd.f32 0.0, %v1829
      %1831 = vdwg.mxu0
      %v1840 = vunpack.c.l.b16 %v1643
      %v1841 = vunpack.c.l.b16 %v1644
      %v1842 = vunpack.c.l.b16 %v1645
      %v1843 = vunpack.c.l.b16 %v1646
      %v1844 = vunpack.c.l.b16 %v1647
      %v1845 = vunpack.c.l.b16 %v1648
      %v1846 = vunpack.c.l.b16 %v1649
      %v1847 = vunpack.c.l.b16 %v1650
      %v1848 = vpack.c.b16 %v1841, %v1840
      %v1849 = vpack.c.b16 %v1843, %v1842
      %v1850 = vpack.c.b16 %v1845, %v1844
      %v1851 = vpack.c.b16 %v1847, %v1846
      %v1853 = vsel %vm1786, %v1848, 0
      %v1856 = vsel %vm1786, %v1849, 0
      %v1859 = vsel %vm1786, %v1850, 0
      %v1862 = vsel %vm1786, %v1851, 0
      %v1865 = vsel %vm1799, %v1651, 0
      %1867 = vmatpush.bf16.msra.mxu0 0
      %1868 = vmatpush.bf16.msra.mxu0 0
      %1869 = vmatpush.bf16.msra.mxu0 0
      %1870 = vmatpush.bf16.msra.mxu0 0
      %1871 = vmatpush.bf16.msra.mxu0 0
      %1872 = vmatpush.bf16.msra.mxu0 0
      %1873 = vmatpush.bf16.msra.mxu0 0
      %1874 = vmatpush.bf16.msra.mxu0 %v1865
      %1875 = vmatmul.bf16.gmra.mxu0 %v1853
      %v1876 = vpop.f32.mrf.mxu0
      %v1877 = vadd.f32 %v1813, %v1876
      %v1878 = vpop.f32.mrf.mxu0
      %v1879 = vadd.f32 %v1815, %v1878
      %1880 = vmatmul.bf16.gmra.mxu0 %v1856
      %v1881 = vpop.f32.mrf.mxu0
      %v1882 = vadd.f32 %v1818, %v1881
      %v1883 = vpop.f32.mrf.mxu0
      %v1884 = vadd.f32 %v1820, %v1883
      %1885 = vmatmul.bf16.gmra.mxu0 %v1859
      %v1886 = vpop.f32.mrf.mxu0
      %v1887 = vadd.f32 %v1823, %v1886
      %v1888 = vpop.f32.mrf.mxu0
      %v1889 = vadd.f32 %v1825, %v1888
      %1890 = vmatmul.bf16.gmra.mxu0 %v1862
      %v1891 = vpop.f32.mrf.mxu0
      %v1892 = vadd.f32 %v1828, %v1891
      %v1893 = vpop.f32.mrf.mxu0
      %v1894 = vadd.f32 %v1830, %v1893
      %1895 = vdwg.mxu0
      %v1896 = vld [vmem:[#allocation2] sm:$0xe]
      %v1897 = vld [vmem:[#allocation2 + $0x8] sm:$0xe]
      %v1898 = vld [vmem:[#allocation2 + $0x10] sm:$0xe]
      %v1899 = vld [vmem:[#allocation2 + $0x18] sm:$0xe]
      %v1900 = vld [vmem:[#allocation2 + $0x20] sm:$0xe]
      %v1901 = vld [vmem:[#allocation2 + $0x28] sm:$0xe]
      %v1902 = vld [vmem:[#allocation2 + $0x30] sm:$0xe]
      %v1903 = vld [vmem:[#allocation2 + $0x38] sm:$0xe]
      %vm1920 = vcmask 1042432
      %vm1921 = vcmask 1046532
      %vm1922 = vmor %vm1920, %vm1921
      %v1923 = vrot.slane %v1896, 5
      %v1924 = vrot.slane %v1923, 4
      %v1925 = vrot.slane %v1652, 5
      %v1926 = vsel %vm1922, %v1924, %v1925
      %v1927 = vrot.slane %v1897, 5
      %v1928 = vrot.slane %v1927, 4
      %v1929 = vrot.slane %v1653, 5
      %v1930 = vsel %vm1922, %v1928, %v1929
      %v1931 = vrot.slane %v1898, 5
      %v1932 = vrot.slane %v1931, 4
      %v1933 = vrot.slane %v1654, 5
      %v1934 = vsel %vm1922, %v1932, %v1933
      %v1935 = vrot.slane %v1899, 5
      %v1936 = vrot.slane %v1935, 4
      %v1937 = vrot.slane %v1655, 5
      %v1938 = vsel %vm1922, %v1936, %v1937
      %v1939 = vrot.slane %v1900, 5
      %v1940 = vrot.slane %v1939, 4
      %v1941 = vrot.slane %v1656, 5
      %v1942 = vsel %vm1922, %v1940, %v1941
      %v1943 = vrot.slane %v1901, 5
      %v1944 = vrot.slane %v1943, 4
      %v1945 = vrot.slane %v1657, 5
      %v1946 = vsel %vm1922, %v1944, %v1945
      %v1947 = vrot.slane %v1902, 5
      %v1948 = vrot.slane %v1947, 4
      %v1949 = vrot.slane %v1658, 5
      %v1950 = vsel %vm1922, %v1948, %v1949
      %v1951 = vrot.slane %v1903, 5
      %v1952 = vrot.slane %v1951, 4
      %v1953 = vrot.slane %v1659, 5
      %v1954 = vsel %vm1922, %v1952, %v1953
      %s1955 = scalar_lea.vmem %s6, 8
      %v1956 = vld [vmem:[%s1955] sm:$0xf]
      %v1957 = vunpack.c.l.b16 %v1926
      %v1958 = vunpack.c.l.b16 %v1930
      %v1959 = vunpack.c.l.b16 %v1934
      %v1960 = vunpack.c.l.b16 %v1938
      %v1961 = vunpack.c.l.b16 %v1942
      %v1962 = vunpack.c.l.b16 %v1946
      %v1963 = vunpack.c.l.b16 %v1950
      %v1964 = vunpack.c.l.b16 %v1954
      %v1965 = vpack.c.b16 %v1958, %v1957
      %v1966 = vpack.c.b16 %v1960, %v1959
      %v1967 = vpack.c.b16 %v1962, %v1961
      %v1968 = vpack.c.b16 %v1964, %v1963
      %v1970 = vsel %vm1786, %v1965, 0
      %v1973 = vsel %vm1786, %v1966, 0
      %v1976 = vsel %vm1786, %v1967, 0
      %v1979 = vsel %vm1786, %v1968, 0
      %v1982 = vsel %vm1799, %v1956, 0
      %1984 = vmatpush.bf16.msra.mxu0 0
      %1985 = vmatpush.bf16.msra.mxu0 0
      %1986 = vmatpush.bf16.msra.mxu0 0
      %1987 = vmatpush.bf16.msra.mxu0 0
      %1988 = vmatpush.bf16.msra.mxu0 0
      %1989 = vmatpush.bf16.msra.mxu0 0
      %1990 = vmatpush.bf16.msra.mxu0 0
      %1991 = vmatpush.bf16.msra.mxu0 %v1982
      %1992 = vmatmul.bf16.gmra.mxu0 %v1970
      %v1993 = vpop.f32.mrf.mxu0
      %v1994 = vadd.f32 0.0, %v1993
      %v1995 = vpop.f32.mrf.mxu0
      %v1996 = vadd.f32 0.0, %v1995
      %1997 = vmatmul.bf16.gmra.mxu0 %v1973
      %v1998 = vpop.f32.mrf.mxu0
      %v1999 = vadd.f32 0.0, %v1998
      %v2000 = vpop.f32.mrf.mxu0
      %v2001 = vadd.f32 0.0, %v2000
      %2002 = vmatmul.bf16.gmra.mxu0 %v1976
      %v2003 = vpop.f32.mrf.mxu0
      %v2004 = vadd.f32 0.0, %v2003
      %v2005 = vpop.f32.mrf.mxu0
      %v2006 = vadd.f32 0.0, %v2005
      %2007 = vmatmul.bf16.gmra.mxu0 %v1979
      %v2008 = vpop.f32.mrf.mxu0
      %v2009 = vadd.f32 0.0, %v2008
      %v2010 = vpop.f32.mrf.mxu0
      %v2011 = vadd.f32 0.0, %v2010
      %2012 = vdwg.mxu0
      %v2013 = vadd.f32 %v1877, %v1994
      %v2014 = vadd.f32 %v1879, %v1996
      %v2015 = vadd.f32 %v1882, %v1999
      %v2016 = vadd.f32 %v1884, %v2001
      %v2017 = vadd.f32 %v1887, %v2004
      %v2018 = vadd.f32 %v1889, %v2006
      %v2019 = vadd.f32 %v1892, %v2009
      %v2020 = vadd.f32 %v1894, %v2011
      %v2021 = vld [vmem:[%s1588] sm:$0xf]
      %v2022 = vld [vmem:[%s1588 + $0x8] sm:$0xf]
      %v2023 = vld [vmem:[%s1588 + $0x10] sm:$0xf]
      %v2024 = vld [vmem:[%s1588 + $0x18] sm:$0xf]
      %v2025 = vld [vmem:[%s1588 + $0x20] sm:$0xf]
      %v2026 = vld [vmem:[%s1588 + $0x28] sm:$0xf]
      %v2027 = vld [vmem:[%s1588 + $0x30] sm:$0xf]
      %v2028 = vld [vmem:[%s1588 + $0x38] sm:$0xf]
      %s2029 = scalar_lea.vmem %s6, 12
      %v2030 = vld [vmem:[%s2029] sm:$0xf]
      %v2039 = vunpack.c.l.b16 %v2021
      %v2040 = vunpack.c.l.b16 %v2022
      %v2041 = vunpack.c.l.b16 %v2023
      %v2042 = vunpack.c.l.b16 %v2024
      %v2043 = vunpack.c.l.b16 %v2025
      %v2044 = vunpack.c.l.b16 %v2026
      %v2045 = vunpack.c.l.b16 %v2027
      %v2046 = vunpack.c.l.b16 %v2028
      %v2047 = vpack.c.b16 %v2040, %v2039
      %v2048 = vpack.c.b16 %v2042, %v2041
      %v2049 = vpack.c.b16 %v2044, %v2043
      %v2050 = vpack.c.b16 %v2046, %v2045
      %v2052 = vsel %vm1786, %v2047, 0
      %v2055 = vsel %vm1786, %v2048, 0
      %v2058 = vsel %vm1786, %v2049, 0
      %v2061 = vsel %vm1786, %v2050, 0
      %v2064 = vsel %vm1799, %v2030, 0
      %2066 = vmatpush.bf16.msra.mxu0 0
      %2067 = vmatpush.bf16.msra.mxu0 0
      %2068 = vmatpush.bf16.msra.mxu0 0
      %2069 = vmatpush.bf16.msra.mxu0 0
      %2070 = vmatpush.bf16.msra.mxu0 0
      %2071 = vmatpush.bf16.msra.mxu0 0
      %2072 = vmatpush.bf16.msra.mxu0 0
      %2073 = vmatpush.bf16.msra.mxu0 %v2064
      %2074 = vmatmul.bf16.gmra.mxu0 %v2052
      %v2075 = vpop.f32.mrf.mxu0
      %v2076 = vadd.f32 0.0, %v2075
      %v2077 = vpop.f32.mrf.mxu0
      %v2078 = vadd.f32 0.0, %v2077
      %2079 = vmatmul.bf16.gmra.mxu0 %v2055
      %v2080 = vpop.f32.mrf.mxu0
      %v2081 = vadd.f32 0.0, %v2080
      %v2082 = vpop.f32.mrf.mxu0
      %v2083 = vadd.f32 0.0, %v2082
      %2084 = vmatmul.bf16.gmra.mxu0 %v2058
      %v2085 = vpop.f32.mrf.mxu0
      %v2086 = vadd.f32 0.0, %v2085
      %v2087 = vpop.f32.mrf.mxu0
      %v2088 = vadd.f32 0.0, %v2087
      %2089 = vmatmul.bf16.gmra.mxu0 %v2061
      %v2090 = vpop.f32.mrf.mxu0
      %v2091 = vadd.f32 0.0, %v2090
      %v2092 = vpop.f32.mrf.mxu0
      %v2093 = vadd.f32 0.0, %v2092
      %2094 = vdwg.mxu0
      %v2095 = vadd.f32 %v2013, %v2076
      %v2096 = vadd.f32 %v2014, %v2078
      %v2097 = vadd.f32 %v2015, %v2081
      %v2098 = vadd.f32 %v2016, %v2083
      %v2099 = vadd.f32 %v2017, %v2086
      %v2100 = vadd.f32 %v2018, %v2088
      %v2101 = vadd.f32 %v2019, %v2091
      %v2102 = vadd.f32 %v2020, %v2093
      %v2103 = vld [vmem:[%s1588] sm:$0xf]
      %v2104 = vld [vmem:[%s1588 + $0x4] sm:$0x1]
      %v2105 = vld [vmem:[%s1588 + $0x8] sm:$0xf]
      %v2106 = vld [vmem:[%s1588 + $0xc] sm:$0x1]
      %v2107 = vld [vmem:[%s1588 + $0x10] sm:$0xf]
      %v2108 = vld [vmem:[%s1588 + $0x14] sm:$0x1]
      %v2109 = vld [vmem:[%s1588 + $0x18] sm:$0xf]
      %v2110 = vld [vmem:[%s1588 + $0x1c] sm:$0x1]
      %v2111 = vld [vmem:[%s1588 + $0x20] sm:$0xf]
      %v2112 = vld [vmem:[%s1588 + $0x24] sm:$0x1]
      %v2113 = vld [vmem:[%s1588 + $0x28] sm:$0xf]
      %v2114 = vld [vmem:[%s1588 + $0x2c] sm:$0x1]
      %v2115 = vld [vmem:[%s1588 + $0x30] sm:$0xf]
      %v2116 = vld [vmem:[%s1588 + $0x34] sm:$0x1]
      %v2117 = vld [vmem:[%s1588 + $0x38] sm:$0xf]
      %v2118 = vld [vmem:[%s1588 + $0x3c] sm:$0x1]
      %v2120 = vshrl.u32 %v2103, 16
      %v2122 = vrot.slane %v2120, 4
      %v2123 = vshll.u32 %v2103, 16
      %v2125 = vrot.slane %v2123, 5
      %v2126 = vor.u32 %v2122, %v2125
      %v2127 = vrot.slane %v2126, 4
      %v2129 = vshll.u32 %v2104, 16
      %v2131 = vrot.slane %v2129, 5
      %v2132 = vsel %vm561, %v2127, %v2131
      %v2134 = vshrl.u32 %v2105, 16
      %v2136 = vrot.slane %v2134, 4
      %v2137 = vshll.u32 %v2105, 16
      %v2139 = vrot.slane %v2137, 5
      %v2140 = vor.u32 %v2136, %v2139
      %v2141 = vrot.slane %v2140, 4
      %v2143 = vshll.u32 %v2106, 16
      %v2145 = vrot.slane %v2143, 5
      %v2146 = vsel %vm561, %v2141, %v2145
      %v2148 = vshrl.u32 %v2107, 16
      %v2150 = vrot.slane %v2148, 4
      %v2151 = vshll.u32 %v2107, 16
      %v2153 = vrot.slane %v2151, 5
      %v2154 = vor.u32 %v2150, %v2153
      %v2155 = vrot.slane %v2154, 4
      %v2157 = vshll.u32 %v2108, 16
      %v2159 = vrot.slane %v2157, 5
      %v2160 = vsel %vm561, %v2155, %v2159
      %v2162 = vshrl.u32 %v2109, 16
      %v2164 = vrot.slane %v2162, 4
      %v2165 = vshll.u32 %v2109, 16
      %v2167 = vrot.slane %v2165, 5
      %v2168 = vor.u32 %v2164, %v2167
      %v2169 = vrot.slane %v2168, 4
      %v2171 = vshll.u32 %v2110, 16
      %v2173 = vrot.slane %v2171, 5
      %v2174 = vsel %vm561, %v2169, %v2173
      %v2176 = vshrl.u32 %v2111, 16
      %v2178 = vrot.slane %v2176, 4
      %v2179 = vshll.u32 %v2111, 16
      %v2181 = vrot.slane %v2179, 5
      %v2182 = vor.u32 %v2178, %v2181
      %v2183 = vrot.slane %v2182, 4
      %v2185 = vshll.u32 %v2112, 16
      %v2187 = vrot.slane %v2185, 5
      %v2188 = vsel %vm561, %v2183, %v2187
      %v2190 = vshrl.u32 %v2113, 16
      %v2192 = vrot.slane %v2190, 4
      %v2193 = vshll.u32 %v2113, 16
      %v2195 = vrot.slane %v2193, 5
      %v2196 = vor.u32 %v2192, %v2195
      %v2197 = vrot.slane %v2196, 4
      %v2199 = vshll.u32 %v2114, 16
      %v2201 = vrot.slane %v2199, 5
      %v2202 = vsel %vm561, %v2197, %v2201
      %v2204 = vshrl.u32 %v2115, 16
      %v2206 = vrot.slane %v2204, 4
      %v2207 = vshll.u32 %v2115, 16
      %v2209 = vrot.slane %v2207, 5
      %v2210 = vor.u32 %v2206, %v2209
      %v2211 = vrot.slane %v2210, 4
      %v2213 = vshll.u32 %v2116, 16
      %v2215 = vrot.slane %v2213, 5
      %v2216 = vsel %vm561, %v2211, %v2215
      %v2218 = vshrl.u32 %v2117, 16
      %v2220 = vrot.slane %v2218, 4
      %v2221 = vshll.u32 %v2117, 16
      %v2223 = vrot.slane %v2221, 5
      %v2224 = vor.u32 %v2220, %v2223
      %v2225 = vrot.slane %v2224, 4
      %v2227 = vshll.u32 %v2118, 16
      %v2229 = vrot.slane %v2227, 5
      %v2230 = vsel %vm561, %v2225, %v2229
      %s2231 = scalar_lea.vmem %s6, 16
      %v2232 = vld [vmem:[%s2231] sm:$0xf]
      %v2233 = vunpack.c.l.b16 %v2132
      %v2234 = vunpack.c.l.b16 %v2146
      %v2235 = vunpack.c.l.b16 %v2160
      %v2236 = vunpack.c.l.b16 %v2174
      %v2237 = vunpack.c.l.b16 %v2188
      %v2238 = vunpack.c.l.b16 %v2202
      %v2239 = vunpack.c.l.b16 %v2216
      %v2240 = vunpack.c.l.b16 %v2230
      %v2241 = vpack.c.b16 %v2234, %v2233
      %v2242 = vpack.c.b16 %v2236, %v2235
      %v2243 = vpack.c.b16 %v2238, %v2237
      %v2244 = vpack.c.b16 %v2240, %v2239
      %v2246 = vsel %vm1786, %v2241, 0
      %v2249 = vsel %vm1786, %v2242, 0
      %v2252 = vsel %vm1786, %v2243, 0
      %v2255 = vsel %vm1786, %v2244, 0
      %v2258 = vsel %vm1799, %v2232, 0
      %2260 = vmatpush.bf16.msra.mxu0 0
      %2261 = vmatpush.bf16.msra.mxu0 0
      %2262 = vmatpush.bf16.msra.mxu0 0
      %2263 = vmatpush.bf16.msra.mxu0 0
      %2264 = vmatpush.bf16.msra.mxu0 0
      %2265 = vmatpush.bf16.msra.mxu0 0
      %2266 = vmatpush.bf16.msra.mxu0 0
      %2267 = vmatpush.bf16.msra.mxu0 %v2258
      %2268 = vmatmul.bf16.gmra.mxu0 %v2246
      %v2269 = vpop.f32.mrf.mxu0
      %v2270 = vadd.f32 0.0, %v2269
      %v2271 = vpop.f32.mrf.mxu0
      %v2272 = vadd.f32 0.0, %v2271
      %2273 = vmatmul.bf16.gmra.mxu0 %v2249
      %v2274 = vpop.f32.mrf.mxu0
      %v2275 = vadd.f32 0.0, %v2274
      %v2276 = vpop.f32.mrf.mxu0
      %v2277 = vadd.f32 0.0, %v2276
      %2278 = vmatmul.bf16.gmra.mxu0 %v2252
      %v2279 = vpop.f32.mrf.mxu0
      %v2280 = vadd.f32 0.0, %v2279
      %v2281 = vpop.f32.mrf.mxu0
      %v2282 = vadd.f32 0.0, %v2281
      %2283 = vmatmul.bf16.gmra.mxu0 %v2255
      %v2284 = vpop.f32.mrf.mxu0
      %v2285 = vadd.f32 0.0, %v2284
      %v2286 = vpop.f32.mrf.mxu0
      %v2287 = vadd.f32 0.0, %v2286
      %2288 = vdwg.mxu0
      %v2289 = vadd.f32 %v2095, %v2270
      %v2290 = vadd.f32 %v2096, %v2272
      %v2291 = vadd.f32 %v2097, %v2275
      %v2292 = vadd.f32 %v2098, %v2277
      %v2293 = vadd.f32 %v2099, %v2280
      %v2294 = vadd.f32 %v2100, %v2282
      %v2295 = vadd.f32 %v2101, %v2285
      %v2296 = vadd.f32 %v2102, %v2287
      %v2297 = vld [vmem:[%s1588] sm:$0xe]
      %v2298 = vld [vmem:[%s1588 + $0x8] sm:$0xe]
      %v2299 = vld [vmem:[%s1588 + $0x10] sm:$0xe]
      %v2300 = vld [vmem:[%s1588 + $0x18] sm:$0xe]
      %v2301 = vld [vmem:[%s1588 + $0x20] sm:$0xe]
      %v2302 = vld [vmem:[%s1588 + $0x28] sm:$0xe]
      %v2303 = vld [vmem:[%s1588 + $0x30] sm:$0xe]
      %v2304 = vld [vmem:[%s1588 + $0x38] sm:$0xe]
      %v2321 = vrot.slane %v2297, 5
      %v2322 = vrot.slane %v2321, 4
      %v2323 = vrot.slane %v2104, 5
      %v2324 = vsel %vm1922, %v2322, %v2323
      %v2325 = vrot.slane %v2298, 5
      %v2326 = vrot.slane %v2325, 4
      %v2327 = vrot.slane %v2106, 5
      %v2328 = vsel %vm1922, %v2326, %v2327
      %v2329 = vrot.slane %v2299, 5
      %v2330 = vrot.slane %v2329, 4
      %v2331 = vrot.slane %v2108, 5
      %v2332 = vsel %vm1922, %v2330, %v2331
      %v2333 = vrot.slane %v2300, 5
      %v2334 = vrot.slane %v2333, 4
      %v2335 = vrot.slane %v2110, 5
      %v2336 = vsel %vm1922, %v2334, %v2335
      %v2337 = vrot.slane %v2301, 5
      %v2338 = vrot.slane %v2337, 4
      %v2339 = vrot.slane %v2112, 5
      %v2340 = vsel %vm1922, %v2338, %v2339
      %v2341 = vrot.slane %v2302, 5
      %v2342 = vrot.slane %v2341, 4
      %v2343 = vrot.slane %v2114, 5
      %v2344 = vsel %vm1922, %v2342, %v2343
      %v2345 = vrot.slane %v2303, 5
      %v2346 = vrot.slane %v2345, 4
      %v2347 = vrot.slane %v2116, 5
      %v2348 = vsel %vm1922, %v2346, %v2347
      %v2349 = vrot.slane %v2304, 5
      %v2350 = vrot.slane %v2349, 4
      %v2351 = vrot.slane %v2118, 5
      %v2352 = vsel %vm1922, %v2350, %v2351
      %s2353 = scalar_lea.vmem %s6, 20
      %v2354 = vld [vmem:[%s2353] sm:$0xf]
      %v2355 = vunpack.c.l.b16 %v2324
      %v2356 = vunpack.c.l.b16 %v2328
      %v2357 = vunpack.c.l.b16 %v2332
      %v2358 = vunpack.c.l.b16 %v2336
      %v2359 = vunpack.c.l.b16 %v2340
      %v2360 = vunpack.c.l.b16 %v2344
      %v2361 = vunpack.c.l.b16 %v2348
      %v2362 = vunpack.c.l.b16 %v2352
      %v2363 = vpack.c.b16 %v2356, %v2355
      %v2364 = vpack.c.b16 %v2358, %v2357
      %v2365 = vpack.c.b16 %v2360, %v2359
      %v2366 = vpack.c.b16 %v2362, %v2361
      %v2368 = vsel %vm1786, %v2363, 0
      %v2371 = vsel %vm1786, %v2364, 0
      %v2374 = vsel %vm1786, %v2365, 0
      %v2377 = vsel %vm1786, %v2366, 0
      %v2380 = vsel %vm1799, %v2354, 0
      %2382 = vmatpush.bf16.msra.mxu0 0
      %2383 = vmatpush.bf16.msra.mxu0 0
      %2384 = vmatpush.bf16.msra.mxu0 0
      %2385 = vmatpush.bf16.msra.mxu0 0
      %2386 = vmatpush.bf16.msra.mxu0 0
      %2387 = vmatpush.bf16.msra.mxu0 0
      %2388 = vmatpush.bf16.msra.mxu0 0
      %2389 = vmatpush.bf16.msra.mxu0 %v2380
      %2390 = vmatmul.bf16.gmra.mxu0 %v2368
      %v2391 = vpop.f32.mrf.mxu0
      %v2392 = vadd.f32 0.0, %v2391
      %v2393 = vpop.f32.mrf.mxu0
      %v2394 = vadd.f32 0.0, %v2393
      %2395 = vmatmul.bf16.gmra.mxu0 %v2371
      %v2396 = vpop.f32.mrf.mxu0
      %v2397 = vadd.f32 0.0, %v2396
      %v2398 = vpop.f32.mrf.mxu0
      %v2399 = vadd.f32 0.0, %v2398
      %2400 = vmatmul.bf16.gmra.mxu0 %v2374
      %v2401 = vpop.f32.mrf.mxu0
      %v2402 = vadd.f32 0.0, %v2401
      %v2403 = vpop.f32.mrf.mxu0
      %v2404 = vadd.f32 0.0, %v2403
      %2405 = vmatmul.bf16.gmra.mxu0 %v2377
      %v2406 = vpop.f32.mrf.mxu0
      %v2407 = vadd.f32 0.0, %v2406
      %v2408 = vpop.f32.mrf.mxu0
      %v2409 = vadd.f32 0.0, %v2408
      %2410 = vdwg.mxu0
      %v2411 = vadd.f32 %v2289, %v2392
      %v2412 = vadd.f32 %v2290, %v2394
      %v2413 = vadd.f32 %v2291, %v2397
      %v2414 = vadd.f32 %v2292, %v2399
      %v2415 = vadd.f32 %v2293, %v2402
      %v2416 = vadd.f32 %v2294, %v2404
      %v2417 = vadd.f32 %v2295, %v2407
      %v2418 = vadd.f32 %v2296, %v2409
      %s2419 = scalar_lea.vmem [#allocation2], 16
      %v2420 = vld [vmem:[%s2419] sm:$0xf]
      %v2421 = vld [vmem:[%s2419 + $0x8] sm:$0xf]
      %v2422 = vld [vmem:[%s2419 + $0x10] sm:$0xf]
      %v2423 = vld [vmem:[%s2419 + $0x18] sm:$0xf]
      %v2424 = vld [vmem:[%s2419 + $0x20] sm:$0xf]
      %v2425 = vld [vmem:[%s2419 + $0x28] sm:$0xf]
      %v2426 = vld [vmem:[%s2419 + $0x30] sm:$0xf]
      %v2427 = vld [vmem:[%s2419 + $0x38] sm:$0xf]
      %s2428 = scalar_lea.vmem %s6, 24
      %v2429 = vld [vmem:[%s2428] sm:$0xf]
      %v2438 = vunpack.c.l.b16 %v2420
      %v2439 = vunpack.c.l.b16 %v2421
      %v2440 = vunpack.c.l.b16 %v2422
      %v2441 = vunpack.c.l.b16 %v2423
      %v2442 = vunpack.c.l.b16 %v2424
      %v2443 = vunpack.c.l.b16 %v2425
      %v2444 = vunpack.c.l.b16 %v2426
      %v2445 = vunpack.c.l.b16 %v2427
      %v2446 = vpack.c.b16 %v2439, %v2438
      %v2447 = vpack.c.b16 %v2441, %v2440
      %v2448 = vpack.c.b16 %v2443, %v2442
      %v2449 = vpack.c.b16 %v2445, %v2444
      %v2451 = vsel %vm1786, %v2446, 0
      %v2454 = vsel %vm1786, %v2447, 0
      %v2457 = vsel %vm1786, %v2448, 0
      %v2460 = vsel %vm1786, %v2449, 0
      %v2463 = vsel %vm1799, %v2429, 0
      %2465 = vmatpush.bf16.msra.mxu0 0
      %2466 = vmatpush.bf16.msra.mxu0 0
      %2467 = vmatpush.bf16.msra.mxu0 0
      %2468 = vmatpush.bf16.msra.mxu0 0
      %2469 = vmatpush.bf16.msra.mxu0 0
      %2470 = vmatpush.bf16.msra.mxu0 0
      %2471 = vmatpush.bf16.msra.mxu0 0
      %2472 = vmatpush.bf16.msra.mxu0 %v2463
      %2473 = vmatmul.bf16.gmra.mxu0 %v2451
      %v2474 = vpop.f32.mrf.mxu0
      %v2475 = vadd.f32 0.0, %v2474
      %v2476 = vpop.f32.mrf.mxu0
      %v2477 = vadd.f32 0.0, %v2476
      %2478 = vmatmul.bf16.gmra.mxu0 %v2454
      %v2479 = vpop.f32.mrf.mxu0
      %v2480 = vadd.f32 0.0, %v2479
      %v2481 = vpop.f32.mrf.mxu0
      %v2482 = vadd.f32 0.0, %v2481
      %2483 = vmatmul.bf16.gmra.mxu0 %v2457
      %v2484 = vpop.f32.mrf.mxu0
      %v2485 = vadd.f32 0.0, %v2484
      %v2486 = vpop.f32.mrf.mxu0
      %v2487 = vadd.f32 0.0, %v2486
      %2488 = vmatmul.bf16.gmra.mxu0 %v2460
      %v2489 = vpop.f32.mrf.mxu0
      %v2490 = vadd.f32 0.0, %v2489
      %v2491 = vpop.f32.mrf.mxu0
      %v2492 = vadd.f32 0.0, %v2491
      %2493 = vdwg.mxu0
      %v2494 = vadd.f32 %v2411, %v2475
      %v2495 = vadd.f32 %v2412, %v2477
      %v2496 = vadd.f32 %v2413, %v2480
      %v2497 = vadd.f32 %v2414, %v2482
      %v2498 = vadd.f32 %v2415, %v2485
      %v2499 = vadd.f32 %v2416, %v2487
      %v2500 = vadd.f32 %v2417, %v2490
      %v2501 = vadd.f32 %v2418, %v2492
      %v2502 = vld [vmem:[%s2419] sm:$0xf]
      %v2503 = vld [vmem:[%s2419 + $0x4] sm:$0x1]
      %v2504 = vld [vmem:[%s2419 + $0x8] sm:$0xf]
      %v2505 = vld [vmem:[%s2419 + $0xc] sm:$0x1]
      %v2506 = vld [vmem:[%s2419 + $0x10] sm:$0xf]
      %v2507 = vld [vmem:[%s2419 + $0x14] sm:$0x1]
      %v2508 = vld [vmem:[%s2419 + $0x18] sm:$0xf]
      %v2509 = vld [vmem:[%s2419 + $0x1c] sm:$0x1]
      %v2510 = vld [vmem:[%s2419 + $0x20] sm:$0xf]
      %v2511 = vld [vmem:[%s2419 + $0x24] sm:$0x1]
      %v2512 = vld [vmem:[%s2419 + $0x28] sm:$0xf]
      %v2513 = vld [vmem:[%s2419 + $0x2c] sm:$0x1]
      %v2514 = vld [vmem:[%s2419 + $0x30] sm:$0xf]
      %v2515 = vld [vmem:[%s2419 + $0x34] sm:$0x1]
      %v2516 = vld [vmem:[%s2419 + $0x38] sm:$0xf]
      %v2517 = vld [vmem:[%s2419 + $0x3c] sm:$0x1]
      %v2519 = vshrl.u32 %v2502, 16
      %v2521 = vrot.slane %v2519, 4
      %v2522 = vshll.u32 %v2502, 16
      %v2524 = vrot.slane %v2522, 5
      %v2525 = vor.u32 %v2521, %v2524
      %v2526 = vrot.slane %v2525, 4
      %v2528 = vshll.u32 %v2503, 16
      %v2530 = vrot.slane %v2528, 5
      %v2531 = vsel %vm561, %v2526, %v2530
      %v2533 = vshrl.u32 %v2504, 16
      %v2535 = vrot.slane %v2533, 4
      %v2536 = vshll.u32 %v2504, 16
      %v2538 = vrot.slane %v2536, 5
      %v2539 = vor.u32 %v2535, %v2538
      %v2540 = vrot.slane %v2539, 4
      %v2542 = vshll.u32 %v2505, 16
      %v2544 = vrot.slane %v2542, 5
      %v2545 = vsel %vm561, %v2540, %v2544
      %v2547 = vshrl.u32 %v2506, 16
      %v2549 = vrot.slane %v2547, 4
      %v2550 = vshll.u32 %v2506, 16
      %v2552 = vrot.slane %v2550, 5
      %v2553 = vor.u32 %v2549, %v2552
      %v2554 = vrot.slane %v2553, 4
      %v2556 = vshll.u32 %v2507, 16
      %v2558 = vrot.slane %v2556, 5
      %v2559 = vsel %vm561, %v2554, %v2558
      %v2561 = vshrl.u32 %v2508, 16
      %v2563 = vrot.slane %v2561, 4
      %v2564 = vshll.u32 %v2508, 16
      %v2566 = vrot.slane %v2564, 5
      %v2567 = vor.u32 %v2563, %v2566
      %v2568 = vrot.slane %v2567, 4
      %v2570 = vshll.u32 %v2509, 16
      %v2572 = vrot.slane %v2570, 5
      %v2573 = vsel %vm561, %v2568, %v2572
      %v2575 = vshrl.u32 %v2510, 16
      %v2577 = vrot.slane %v2575, 4
      %v2578 = vshll.u32 %v2510, 16
      %v2580 = vrot.slane %v2578, 5
      %v2581 = vor.u32 %v2577, %v2580
      %v2582 = vrot.slane %v2581, 4
      %v2584 = vshll.u32 %v2511, 16
      %v2586 = vrot.slane %v2584, 5
      %v2587 = vsel %vm561, %v2582, %v2586
      %v2589 = vshrl.u32 %v2512, 16
      %v2591 = vrot.slane %v2589, 4
      %v2592 = vshll.u32 %v2512, 16
      %v2594 = vrot.slane %v2592, 5
      %v2595 = vor.u32 %v2591, %v2594
      %v2596 = vrot.slane %v2595, 4
      %v2598 = vshll.u32 %v2513, 16
      %v2600 = vrot.slane %v2598, 5
      %v2601 = vsel %vm561, %v2596, %v2600
      %v2603 = vshrl.u32 %v2514, 16
      %v2605 = vrot.slane %v2603, 4
      %v2606 = vshll.u32 %v2514, 16
      %v2608 = vrot.slane %v2606, 5
      %v2609 = vor.u32 %v2605, %v2608
      %v2610 = vrot.slane %v2609, 4
      %v2612 = vshll.u32 %v2515, 16
      %v2614 = vrot.slane %v2612, 5
      %v2615 = vsel %vm561, %v2610, %v2614
      %v2617 = vshrl.u32 %v2516, 16
      %v2619 = vrot.slane %v2617, 4
      %v2620 = vshll.u32 %v2516, 16
      %v2622 = vrot.slane %v2620, 5
      %v2623 = vor.u32 %v2619, %v2622
      %v2624 = vrot.slane %v2623, 4
      %v2626 = vshll.u32 %v2517, 16
      %v2628 = vrot.slane %v2626, 5
      %v2629 = vsel %vm561, %v2624, %v2628
      %s2630 = scalar_lea.vmem %s6, 28
      %v2631 = vld [vmem:[%s2630] sm:$0xf]
      %v2632 = vunpack.c.l.b16 %v2531
      %v2633 = vunpack.c.l.b16 %v2545
      %v2634 = vunpack.c.l.b16 %v2559
      %v2635 = vunpack.c.l.b16 %v2573
      %v2636 = vunpack.c.l.b16 %v2587
      %v2637 = vunpack.c.l.b16 %v2601
      %v2638 = vunpack.c.l.b16 %v2615
      %v2639 = vunpack.c.l.b16 %v2629
      %v2640 = vpack.c.b16 %v2633, %v2632
      %v2641 = vpack.c.b16 %v2635, %v2634
      %v2642 = vpack.c.b16 %v2637, %v2636
      %v2643 = vpack.c.b16 %v2639, %v2638
      %v2645 = vsel %vm1786, %v2640, 0
      %v2648 = vsel %vm1786, %v2641, 0
      %v2651 = vsel %vm1786, %v2642, 0
      %v2654 = vsel %vm1786, %v2643, 0
      %v2657 = vsel %vm1799, %v2631, 0
      %2659 = vmatpush.bf16.msra.mxu0 0
      %2660 = vmatpush.bf16.msra.mxu0 0
      %2661 = vmatpush.bf16.msra.mxu0 0
      %2662 = vmatpush.bf16.msra.mxu0 0
      %2663 = vmatpush.bf16.msra.mxu0 0
      %2664 = vmatpush.bf16.msra.mxu0 0
      %2665 = vmatpush.bf16.msra.mxu0 0
      %2666 = vmatpush.bf16.msra.mxu0 %v2657
      %2667 = vmatmul.bf16.gmra.mxu0 %v2645
      %v2668 = vpop.f32.mrf.mxu0
      %v2669 = vadd.f32 0.0, %v2668
      %v2670 = vpop.f32.mrf.mxu0
      %v2671 = vadd.f32 0.0, %v2670
      %2672 = vmatmul.bf16.gmra.mxu0 %v2648
      %v2673 = vpop.f32.mrf.mxu0
      %v2674 = vadd.f32 0.0, %v2673
      %v2675 = vpop.f32.mrf.mxu0
      %v2676 = vadd.f32 0.0, %v2675
      %2677 = vmatmul.bf16.gmra.mxu0 %v2651
      %v2678 = vpop.f32.mrf.mxu0
      %v2679 = vadd.f32 0.0, %v2678
      %v2680 = vpop.f32.mrf.mxu0
      %v2681 = vadd.f32 0.0, %v2680
      %2682 = vmatmul.bf16.gmra.mxu0 %v2654
      %v2683 = vpop.f32.mrf.mxu0
      %v2684 = vadd.f32 0.0, %v2683
      %v2685 = vpop.f32.mrf.mxu0
      %v2686 = vadd.f32 0.0, %v2685
      %2687 = vdwg.mxu0
      %v2688 = vadd.f32 %v2494, %v2669
      %v2689 = vadd.f32 %v2495, %v2671
      %v2690 = vadd.f32 %v2496, %v2674
      %v2691 = vadd.f32 %v2497, %v2676
      %v2692 = vadd.f32 %v2498, %v2679
      %v2693 = vadd.f32 %v2499, %v2681
      %v2694 = vadd.f32 %v2500, %v2684
      %v2695 = vadd.f32 %v2501, %v2686
      %v2696 = vld [vmem:[%s2419] sm:$0xe]
      %v2697 = vld [vmem:[%s2419 + $0x8] sm:$0xe]
      %v2698 = vld [vmem:[%s2419 + $0x10] sm:$0xe]
      %v2699 = vld [vmem:[%s2419 + $0x18] sm:$0xe]
      %v2700 = vld [vmem:[%s2419 + $0x20] sm:$0xe]
      %v2701 = vld [vmem:[%s2419 + $0x28] sm:$0xe]
      %v2702 = vld [vmem:[%s2419 + $0x30] sm:$0xe]
      %v2703 = vld [vmem:[%s2419 + $0x38] sm:$0xe]
      %v2720 = vrot.slane %v2696, 5
      %v2721 = vrot.slane %v2720, 4
      %v2722 = vrot.slane %v2503, 5
      %v2723 = vsel %vm1922, %v2721, %v2722
      %v2724 = vrot.slane %v2697, 5
      %v2725 = vrot.slane %v2724, 4
      %v2726 = vrot.slane %v2505, 5
      %v2727 = vsel %vm1922, %v2725, %v2726
      %v2728 = vrot.slane %v2698, 5
      %v2729 = vrot.slane %v2728, 4
      %v2730 = vrot.slane %v2507, 5
      %v2731 = vsel %vm1922, %v2729, %v2730
      %v2732 = vrot.slane %v2699, 5
      %v2733 = vrot.slane %v2732, 4
      %v2734 = vrot.slane %v2509, 5
      %v2735 = vsel %vm1922, %v2733, %v2734
      %v2736 = vrot.slane %v2700, 5
      %v2737 = vrot.slane %v2736, 4
      %v2738 = vrot.slane %v2511, 5
      %v2739 = vsel %vm1922, %v2737, %v2738
      %v2740 = vrot.slane %v2701, 5
      %v2741 = vrot.slane %v2740, 4
      %v2742 = vrot.slane %v2513, 5
      %v2743 = vsel %vm1922, %v2741, %v2742
      %v2744 = vrot.slane %v2702, 5
      %v2745 = vrot.slane %v2744, 4
      %v2746 = vrot.slane %v2515, 5
      %v2747 = vsel %vm1922, %v2745, %v2746
      %v2748 = vrot.slane %v2703, 5
      %v2749 = vrot.slane %v2748, 4
      %v2750 = vrot.slane %v2517, 5
      %v2751 = vsel %vm1922, %v2749, %v2750
      %s2752 = scalar_lea.vmem %s6, 32
      %v2753 = vld [vmem:[%s2752] sm:$0xf]
      %v2754 = vunpack.c.l.b16 %v2723
      %v2755 = vunpack.c.l.b16 %v2727
      %v2756 = vunpack.c.l.b16 %v2731
      %v2757 = vunpack.c.l.b16 %v2735
      %v2758 = vunpack.c.l.b16 %v2739
      %v2759 = vunpack.c.l.b16 %v2743
      %v2760 = vunpack.c.l.b16 %v2747
      %v2761 = vunpack.c.l.b16 %v2751
      %v2762 = vpack.c.b16 %v2755, %v2754
      %v2763 = vpack.c.b16 %v2757, %v2756
      %v2764 = vpack.c.b16 %v2759, %v2758
      %v2765 = vpack.c.b16 %v2761, %v2760
      %v2767 = vsel %vm1786, %v2762, 0
      %v2770 = vsel %vm1786, %v2763, 0
      %v2773 = vsel %vm1786, %v2764, 0
      %v2776 = vsel %vm1786, %v2765, 0
      %v2779 = vsel %vm1799, %v2753, 0
      %2781 = vmatpush.bf16.msra.mxu0 0
      %2782 = vmatpush.bf16.msra.mxu0 0
      %2783 = vmatpush.bf16.msra.mxu0 0
      %2784 = vmatpush.bf16.msra.mxu0 0
      %2785 = vmatpush.bf16.msra.mxu0 0
      %2786 = vmatpush.bf16.msra.mxu0 0
      %2787 = vmatpush.bf16.msra.mxu0 0
      %2788 = vmatpush.bf16.msra.mxu0 %v2779
      %2789 = vmatmul.bf16.gmra.mxu0 %v2767
      %v2790 = vpop.f32.mrf.mxu0
      %v2791 = vadd.f32 0.0, %v2790
      %v2792 = vpop.f32.mrf.mxu0
      %v2793 = vadd.f32 0.0, %v2792
      %2794 = vmatmul.bf16.gmra.mxu0 %v2770
      %v2795 = vpop.f32.mrf.mxu0
      %v2796 = vadd.f32 0.0, %v2795
      %v2797 = vpop.f32.mrf.mxu0
      %v2798 = vadd.f32 0.0, %v2797
      %2799 = vmatmul.bf16.gmra.mxu0 %v2773
      %v2800 = vpop.f32.mrf.mxu0
      %v2801 = vadd.f32 0.0, %v2800
      %v2802 = vpop.f32.mrf.mxu0
      %v2803 = vadd.f32 0.0, %v2802
      %2804 = vmatmul.bf16.gmra.mxu0 %v2776
      %v2805 = vpop.f32.mrf.mxu0
      %v2806 = vadd.f32 0.0, %v2805
      %v2807 = vpop.f32.mrf.mxu0
      %v2808 = vadd.f32 0.0, %v2807
      %2809 = vdwg.mxu0
      %v2810 = vadd.f32 %v2688, %v2791
      %v2811 = vadd.f32 %v2689, %v2793
      %v2812 = vadd.f32 %v2690, %v2796
      %v2813 = vadd.f32 %v2691, %v2798
      %v2814 = vadd.f32 %v2692, %v2801
      %v2815 = vadd.f32 %v2693, %v2803
      %v2816 = vadd.f32 %v2694, %v2806
      %v2817 = vadd.f32 %v2695, %v2808
      %v2818 = vld [vmem:[%s387] sm:$0xf]
      %v2819 = vld [vmem:[%s387 + $0x8] sm:$0xf]
      %v2820 = vld [vmem:[%s387 + $0x10] sm:$0xf]
      %v2821 = vld [vmem:[%s387 + $0x18] sm:$0xf]
      %v2822 = vld [vmem:[%s387 + $0x20] sm:$0xf]
      %v2823 = vld [vmem:[%s387 + $0x28] sm:$0xf]
      %v2824 = vld [vmem:[%s387 + $0x30] sm:$0xf]
      %v2825 = vld [vmem:[%s387 + $0x38] sm:$0xf]
      %v2826 = vld [vmem:[%s8] sm:$0x3]
      %v2835 = vunpack.c.l.b16 %v2818
      %v2836 = vunpack.c.l.b16 %v2819
      %v2837 = vunpack.c.l.b16 %v2820
      %v2838 = vunpack.c.l.b16 %v2821
      %v2839 = vunpack.c.l.b16 %v2822
      %v2840 = vunpack.c.l.b16 %v2823
      %v2841 = vunpack.c.l.b16 %v2824
      %v2842 = vunpack.c.l.b16 %v2825
      %v2843 = vpack.c.b16 %v2836, %v2835
      %v2844 = vpack.c.b16 %v2838, %v2837
      %v2845 = vpack.c.b16 %v2840, %v2839
      %v2846 = vpack.c.b16 %v2842, %v2841
      %v2848 = vsel %vm433, %v2843, 0
      %v2851 = vsel %vm433, %v2844, 0
      %v2854 = vsel %vm433, %v2845, 0
      %v2857 = vsel %vm433, %v2846, 0
      %v2860 = vsel %vm446, %v2826, 0
      %2862 = vmatpush.bf16.msra.mxu0 0
      %2863 = vmatpush.bf16.msra.mxu0 0
      %2864 = vmatpush.bf16.msra.mxu0 0
      %2865 = vmatpush.bf16.msra.mxu0 0
      %2866 = vmatpush.bf16.msra.mxu0 0
      %2867 = vmatpush.bf16.msra.mxu0 0
      %2868 = vmatpush.bf16.msra.mxu0 0
      %2869 = vmatpush.bf16.msra.mxu0 %v2860
      %2870 = vmatmul.bf16.gmra.mxu0 %v2848
      %v2871 = vpop.f32.mrf.mxu0
      %v2872 = vadd.f32 0.0, %v2871
      %v2873 = vpop.f32.mrf.mxu0
      %v2874 = vadd.f32 0.0, %v2873
      %2875 = vmatmul.bf16.gmra.mxu0 %v2851
      %v2876 = vpop.f32.mrf.mxu0
      %v2877 = vadd.f32 0.0, %v2876
      %v2878 = vpop.f32.mrf.mxu0
      %v2879 = vadd.f32 0.0, %v2878
      %2880 = vmatmul.bf16.gmra.mxu0 %v2854
      %v2881 = vpop.f32.mrf.mxu0
      %v2882 = vadd.f32 0.0, %v2881
      %v2883 = vpop.f32.mrf.mxu0
      %v2884 = vadd.f32 0.0, %v2883
      %2885 = vmatmul.bf16.gmra.mxu0 %v2857
      %v2886 = vpop.f32.mrf.mxu0
      %v2887 = vadd.f32 0.0, %v2886
      %v2888 = vpop.f32.mrf.mxu0
      %v2889 = vadd.f32 0.0, %v2888
      %2890 = vdwg.mxu0
      %v2891 = vadd.f32 %v2810, %v2872
      %v2892 = vadd.f32 %v2811, %v2874
      %v2893 = vadd.f32 %v2812, %v2877
      %v2894 = vadd.f32 %v2813, %v2879
      %v2895 = vadd.f32 %v2814, %v2882
      %v2896 = vadd.f32 %v2815, %v2884
      %v2897 = vadd.f32 %v2816, %v2887
      %v2898 = vadd.f32 %v2817, %v2889
      %v2899 = vld [vmem:[%s7] sm:$0x1]
      %v2901 = vperm.slane %v2899, 0
      %v2903 = vadd.f32 %v2891, %v2901
      %v2904 = vadd.f32 %v2892, %v2901
      %v2905 = vadd.f32 %v2893, %v2901
      %v2906 = vadd.f32 %v2894, %v2901
      %v2907 = vadd.f32 %v2895, %v2901
      %v2908 = vadd.f32 %v2896, %v2901
      %v2909 = vadd.f32 %v2897, %v2901
      %v2910 = vadd.f32 %v2898, %v2901
      %v2911 = vmax.f32 %v2903, 0.0
      %v2912 = vmax.f32 %v2904, 0.0
      %v2913 = vmax.f32 %v2905, 0.0
      %v2914 = vmax.f32 %v2906, 0.0
      %v2915 = vmax.f32 %v2907, 0.0
      %v2916 = vmax.f32 %v2908, 0.0
      %v2917 = vmax.f32 %v2909, 0.0
      %v2918 = vmax.f32 %v2910, 0.0
      %v2919 = vpack.c.bf16 %v2911, %v2911
      %v2920 = vpack.c.bf16 %v2912, %v2912
      %v2921 = vpack.c.bf16 %v2913, %v2913
      %v2922 = vpack.c.bf16 %v2914, %v2914
      %v2923 = vpack.c.bf16 %v2915, %v2915
      %v2924 = vpack.c.bf16 %v2916, %v2916
      %v2925 = vpack.c.bf16 %v2917, %v2917
      %v2926 = vpack.c.bf16 %v2918, %v2918
      %2927 = vst.msk [vmem:[%s392] sm:$0xf] %vm1486, %v2919
      %2928 = vst.msk [vmem:[%s392 + $0x4] sm:$0xf] %vm1486, %v2920
      %2929 = vst.msk [vmem:[%s392 + $0x8] sm:$0xf] %vm1486, %v2921
      %2930 = vst.msk [vmem:[%s392 + $0xc] sm:$0xf] %vm1486, %v2922
      %2931 = vst.msk [vmem:[%s392 + $0x10] sm:$0xf] %vm1486, %v2923
      %2932 = vst.msk [vmem:[%s392 + $0x14] sm:$0xf] %vm1486, %v2924
      %2933 = vst.msk [vmem:[%s392 + $0x18] sm:$0xf] %vm1486, %v2925
      %2934 = vst.msk [vmem:[%s392 + $0x1c] sm:$0xf] %vm1486, %v2926
      %p2935 = scmp.lt.s32.totalorder %s20, 1
      %s2936 = scalar_select %p2935, %s20, 1
      %s2937 = smul.addr %s2936, 8
      %s2938 = smul.addr %s2937, 4
      %s2939 = scalar_lea.vmem %s9, %s2938
      // Predicated region
      $region57: #{basic_block_forward.1} parent=55 // pred_check
        %p2940 = pneg %p247
      $region58: #{basic_block_forward.1} parent=55 // pred_check_branch
        %2942 = sbr.rel (%p2940) target = $region60
      $region59: #{basic_block_forward.1} parent=55 // pred_region
        _
      $region60: #{basic_block_forward.1} parent=55 // pred_fallthru
        _
    $region56: #{basic_block_forward.1} parent=5 // pred_fallthru
      _
    %p2943 = scmp.le.s32.totalorder 2, %s15
    // Predicated region
    $region61: #{basic_block_forward.1} parent=5 // pred_check
      %p2944 = pneg %p2943
    $region62: #{basic_block_forward.1} parent=5 // pred_check_branch
      %2946 = sbr.rel (%p2944) target = $region64
    $region63: #{basic_block_forward.1} parent=5 // pred_region
      %s2947 = ssub.s32 %s15, 2
      // Predicated region
      $region65: #{basic_block_forward.1} parent=63 // pred_check
        %p2948 = pneg %p253
      $region66: #{basic_block_forward.1} parent=63 // pred_check_branch
        %2950 = sbr.rel (%p2948) target = $region68
      $region67: #{basic_block_forward.1} parent=63 // pred_region
        %p2951 = scmp.lt.s32.totalorder %s21, 1
        %s2952 = scalar_select %p2951, %s21, 1
        %s2953 = smul.addr %s2952, 8
        %s2954 = smul.addr %s2953, 4
        %s2955 = scalar_lea.vmem %s9, %s2954
      $region68: #{basic_block_forward.1} parent=63 // pred_fallthru
        _
    $region64: #{basic_block_forward.1} parent=5 // pred_fallthru
      _
  $region6: #{basic_block_forward.1} parent=0 // loop_footer
    %s19 = sadd.s32 1, %s15
  $region7: #{basic_block_forward.1} parent=0 // loop_footer_branch
    %14 = sbr.rel target = $region3
  $region8: #{basic_block_forward.1} parent=0 // loop_exit
    _

</llo_original>
